<compile_context>
chip_gen: v7x
topology: tpu7x:2x2x1
jax: 0.10.0
libtpu: 0.0.40
codegen_flags: <defaults>
</compile_context>

<pallas_src>
import math

import jax
import jax.numpy as jnp
from jax import lax
from jax.experimental import pallas as pl
from jax.experimental.pallas import tpu as pltpu  # noqa: F401  (TPU backend assumed)

# ----------------------------- model config ---------------------------------
B = 2            # batch
S_DEC = 8        # decoder sequence length
S_ENC = 10       # encoder sequence length
ENC_INP_DIM = 32
DEC_INP_DIM = 32
OUT_DIM = 32     # must equal DEC_INP_DIM for the residual adds
KQ_DIM = 16      # per-head query/key dim
NUM_HEADS = 4
LINEAR_STRETCH = 2
LN_EPS = 1e-5
DTYPE = jnp.float32

HEAD_V_DIM = OUT_DIM // NUM_HEADS         # 8
HKQ = NUM_HEADS * KQ_DIM                  # 64  (all-head Q or K width)
HVO = NUM_HEADS * OUT_DIM                 # 128 (per-head V@Wo blocks, stacked on lanes)
FF_DIM = LINEAR_STRETCH * OUT_DIM         # 64

# fused big projection lane layout: [Wq*s | Wk | VO_self | cWk | VO_cross | pad]
SELF_Q_OFF = 0
SELF_K_OFF = HKQ                          # 64
SELF_VO_OFF = 2 * HKQ                     # 128
CROSS_K_OFF = 2 * HKQ + HVO               # 256  (128-aligned)
CROSS_VO_OFF = CROSS_K_OFF + HKQ          # 320
BIG_USED = CROSS_VO_OFF + HVO             # 448
BIG_W = 512                               # pad to full MXU / vreg tiles

QFF_W = HKQ + FF_DIM                      # 128: [cWq*s | FF1]

NQ = B * S_DEC                            # 16 folded decoder rows
NE = B * S_ENC                            # 20 folded encoder rows
XE_ROWS = 40                              # NQ + NE padded to a multiple of 8

PP_W = BIG_W                              # packed small-param width
PP_ROWS = 32
MASK_ROW = 16                             # 8-aligned row where the masks start
CROSS_MASK_LANE = 128                     # 128-aligned lane where cross mask starts

# finite, dtype-aware "minus infinity" (avoids -inf/NaN paths)
_NEG = -0.5 * float(jnp.finfo(jnp.float32).max)


# ------------------------------ kernel helpers --------------------------------
def _layernorm(x, gamma, beta):
    mu = jnp.mean(x, axis=-1, keepdims=True)
    d = x - mu
    var = jnp.mean(d * d, axis=-1, keepdims=True)
    return d * lax.rsqrt(var + LN_EPS) * gamma + beta


def _attn(qsrc, kvsrc, q_off, k_off, vo_off, add_mask, bias_out):
    """Batch-folded multi-head attention.

    qsrc : (n_q, _)  rows hold the (already scaled+biased) Q projection,
           head h at lanes [q_off + h*KQ_DIM, q_off + (h+1)*KQ_DIM).
    kvsrc: (n_kv, _) rows hold K at [k_off + h*KQ_DIM) and the fused per-head
           V@Wo projection at [vo_off + h*OUT_DIM).
    add_mask: (n_q, n_kv) additive bias (0 or -BIG) encoding causal/same-batch.
    Returns (n_q, OUT_DIM) = sum_h softmax(q_h k_h^T + mask) @ vo_h + bias_out.
    """
    n_q = qsrc.shape[0]
    acc = jnp.zeros((n_q, OUT_DIM), jnp.float32)
    for h in range(NUM_HEADS):                 # static unroll over heads
        qh = qsrc[:, q_off + h * KQ_DIM:q_off + (h + 1) * KQ_DIM]
        kh = kvsrc[:, k_off + h * KQ_DIM:k_off + (h + 1) * KQ_DIM]
        # scores = qh @ kh.T (contract feature dims; no explicit transpose)
        s = lax.dot_general(qh, kh, (((1,), (1,)), ((), ())),
                            preferred_element_type=jnp.float32)
        s = s + add_mask
        s = s - jnp.max(s, axis=-1, keepdims=True)
        p = jnp.exp(s)
        p = p / jnp.sum(p, axis=-1, keepdims=True)   # exact softmax (see review)
        voh = kvsrc[:, vo_off + h * OUT_DIM:vo_off + (h + 1) * OUT_DIM]
        acc = acc + jnp.dot(p, voh, preferred_element_type=jnp.float32)
    return acc + bias_out


# ------------------------------ kernel body ------------------------------------
def decoder_layer_kernel(xe_ref, wbig_ref, wqff_ref, wff2_ref, pp_ref, out_ref):
    xe = xe_ref[...]          # (40, 32): rows 0:16 = x, rows 16:36 = e, 36:40 pad
    pp = pp_ref[...]          # (32, 512) packed small params + additive masks

    b_all = pp[0:1, :]                         # bias row for the big projection
    b_qff = pp[1:2, :QFF_W]                    # [cbq*scale | ff1b]
    b_so = pp[2:3, :OUT_DIM]                   # bv @ wo + bo
    b_co = pp[3:4, :OUT_DIM]                   # cbv @ cwo + cbo
    b_ff2 = pp[4:5, :OUT_DIM]
    ln1g, ln1b = pp[5:6, :OUT_DIM], pp[6:7, :OUT_DIM]
    ln2g, ln2b = pp[7:8, :OUT_DIM], pp[8:9, :OUT_DIM]
    ln3g, ln3b = pp[9:10, :OUT_DIM], pp[10:11, :OUT_DIM]
    mask_self = pp[MASK_ROW:MASK_ROW + NQ, 0:NQ]                                 # (16,16)
    mask_cross = pp[MASK_ROW:MASK_ROW + NQ, CROSS_MASK_LANE:CROSS_MASK_LANE + NE]  # (16,20)

    # ---- one merged input projection for both streams (x rows + e rows) ----
    proj = jnp.dot(xe, wbig_ref[...], preferred_element_type=jnp.float32) + b_all
    px = proj[0:NQ, :]          # x rows: Q|K|VO_self at lanes 0:256 (rest unused)
    pe = proj[NQ:NQ + NE, :]    # e rows: K|VO_cross at lanes 256:448 (rest unused)
    x = xe[0:NQ, :]             # residual stream

    # ---- masked self-attention + residual + layernorm1 (dropout == identity) ----
    attn1 = _attn(px, px, SELF_Q_OFF, SELF_K_OFF, SELF_VO_OFF, mask_self, b_so)
    y = _layernorm(attn1 + x, ln1g, ln1b)

    # ---- cross attention (Q from decoder stream, K/V from encoder) ----
    yq = jnp.dot(y, wqff_ref[...], preferred_element_type=jnp.float32) + b_qff
    attn2 = _attn(yq, pe, 0, CROSS_K_OFF, CROSS_VO_OFF, mask_cross, b_co)
    z = _layernorm(attn2 + y, ln2g, ln2b)

    # ---- position-wise feed-forward (shares the cross-Q weight buffer) ----
    h_full = jnp.dot(z, wqff_ref[...], preferred_element_type=jnp.float32) + b_qff
    h_full = jnp.maximum(h_full, 0.0)          # lanes 0:64 are unused (zeroed by wff2 pad)
    h2 = jnp.dot(h_full, wff2_ref[...], preferred_element_type=jnp.float32) + b_ff2
    w = _layernorm(h2 + z, ln3g, ln3b)

    out_ref[...] = w.astype(out_ref.dtype)


# ------------------------------ wrapper --------------------------------------
def pack_params(p):
    """Fold the score scale into Wq, fuse all projections, pack small params/masks."""
    scale = 1.0 / math.sqrt(KQ_DIM)

    def head_vo(wv, wo):
        blocks = [wv[:, h * HEAD_V_DIM:(h + 1) * HEAD_V_DIM]
                  @ wo[h * HEAD_V_DIM:(h + 1) * HEAD_V_DIM, :]
                  for h in range(NUM_HEADS)]
        return jnp.concatenate(blocks, axis=1)            # (in_dim, NUM_HEADS*OUT_DIM)

    # merged big projection weight: x/e rows share one matmul (needs equal in-dims)
    w_big = jnp.concatenate(
        [p["wq"] * scale, p["wk"], head_vo(p["wv"], p["wo"]),
         p["cwk"], head_vo(p["cwv"], p["cwo"]),
         jnp.zeros((DEC_INP_DIM, BIG_W - BIG_USED), DTYPE)], axis=1)          # (32, 512)

    # cross-Q | FF1 merged weight, and FF2 zero-padded so no lane slice is needed
    w_qff = jnp.concatenate([p["cwq"] * scale, p["ff1w"]], axis=1)            # (32, 128)
    w_ff2p = jnp.concatenate([jnp.zeros((HKQ, OUT_DIM), DTYPE), p["ff2w"]], axis=0)  # (128, 32)

    # bias rows
    b_all = jnp.concatenate(
        [p["bq"] * scale, p["bk"], jnp.zeros((1, HVO), DTYPE),
         p["cbk"], jnp.zeros((1, HVO), DTYPE),
         jnp.zeros((1, BIG_W - BIG_USED), DTYPE)], axis=1)                    # (1, 512)
    b_qff = jnp.concatenate([p["cbq"] * scale, p["ff1b"]], axis=1)            # (1, 128)
    b_so = p["bv"] @ p["wo"] + p["bo"]                                        # (1, 32)
    b_co = p["cbv"] @ p["cwo"] + p["cbo"]                                     # (1, 32)

    # additive masks (0 / -BIG): causal AND same-batch for self, same-batch for cross
    qi = jnp.arange(NQ)
    kj = jnp.arange(NQ)
    same_b = (qi[:, None] // S_DEC) == (kj[None, :] // S_DEC)
    causal = (qi[:, None] % S_DEC) >= (kj[None, :] % S_DEC)
    m_self = jnp.where(same_b & causal, 0.0, _NEG).astype(DTYPE)              # (16, 16)
    ke_ = jnp.arange(NE)
    same_bc = (qi[:, None] // S_DEC) == (ke_[None, :] // S_ENC)
    m_cross = jnp.where(same_bc, 0.0, _NEG).astype(DTYPE)                     # (16, 20)

    pp = jnp.zeros((PP_ROWS, PP_W), DTYPE)

    def setrow(buf, i, v):
        return buf.at[i, :v.shape[1]].set(v[0])

    pp = setrow(pp, 0, b_all)
    pp = setrow(pp, 1, b_qff)
    pp = setrow(pp, 2, b_so)
    pp = setrow(pp, 3, b_co)
    pp = setrow(pp, 4, p["ff2b"])
    pp = setrow(pp, 5, p["ln1g"]); pp = setrow(pp, 6, p["ln1b"])
    pp = setrow(pp, 7, p["ln2g"]); pp = setrow(pp, 8, p["ln2b"])
    pp = setrow(pp, 9, p["ln3g"]); pp = setrow(pp, 10, p["ln3b"])
    pp = pp.at[MASK_ROW:MASK_ROW + NQ, 0:NQ].set(m_self)
    pp = pp.at[MASK_ROW:MASK_ROW + NQ, CROSS_MASK_LANE:CROSS_MASK_LANE + NE].set(m_cross)

    return dict(w_big=w_big, w_qff=w_qff, w_ff2p=w_ff2p, pp=pp)


def decoder_layer(x, e, params):
    """x: (B, S_DEC, DEC_INP_DIM), e: (B, S_ENC, ENC_INP_DIM) -> (B, S_DEC, OUT_DIM)."""
    assert DEC_INP_DIM == OUT_DIM, "residual adds require dec_inp_dim == out_dimension"
    assert ENC_INP_DIM == DEC_INP_DIM, "merged x|e projection requires equal input dims"
    assert x.shape == (B, S_DEC, DEC_INP_DIM) and e.shape == (B, S_ENC, ENC_INP_DIM)

    fp = pack_params(params)
    x2 = x.reshape(B * S_DEC, DEC_INP_DIM)
    e2 = e.reshape(B * S_ENC, ENC_INP_DIM)
    pad = jnp.zeros((XE_ROWS - NQ - NE, DEC_INP_DIM), DTYPE)
    xe = jnp.concatenate([x2, e2, pad], axis=0)          # (40, 32)

    # Single invocation, no grid: one fused step beats a per-batch grid at these
    # shapes (~0.35 us fixed overhead per grid step; grid is a serial loop on
    # v5e/v6e).  If many independent layer instances / decode steps exist, add a
    # grid axis over instances with dimension_semantics=("parallel",) instead
    # (feeds the second v7x TensorCore and amortizes launch/DMA cost).
    out2 = pl.pallas_call(
        decoder_layer_kernel,
        out_shape=jax.ShapeDtypeStruct((NQ, OUT_DIM), DTYPE),
    )(xe, fp["w_big"], fp["w_qff"], fp["w_ff2p"], fp["pp"])
    return out2.reshape(B, S_DEC, OUT_DIM)


# --------------------------- param construction -------------------------------
def make_params(key):
    ks = jax.random.split(key, 16)

    def lin(k, fan_in, fan_out):
        bound = 1.0 / math.sqrt(fan_in)
        kw, kb = jax.random.split(k)
        w = jax.random.uniform(kw, (fan_in, fan_out), DTYPE, -bound, bound)
        b = jax.random.uniform(kb, (1, fan_out), DTYPE, -bound, bound)
        return w, b

    p = {}
    # masked self-attention
    p["wq"], p["bq"] = lin(ks[0], DEC_INP_DIM, NUM_HEADS * KQ_DIM)
    p["wk"], p["bk"] = lin(ks[1], DEC_INP_DIM, NUM_HEADS * KQ_DIM)
    p["wv"], p["bv"] = lin(ks[2], DEC_INP_DIM, OUT_DIM)
    p["wo"], p["bo"] = lin(ks[3], OUT_DIM, OUT_DIM)
    # cross attention (Q from decoder, K/V from encoder)
    p["cwq"], p["cbq"] = lin(ks[4], DEC_INP_DIM, NUM_HEADS * KQ_DIM)
    p["cwk"], p["cbk"] = lin(ks[5], ENC_INP_DIM, NUM_HEADS * KQ_DIM)
    p["cwv"], p["cbv"] = lin(ks[6], ENC_INP_DIM, OUT_DIM)
    p["cwo"], p["cbo"] = lin(ks[7], OUT_DIM, OUT_DIM)
    # feed-forward
    p["ff1w"], p["ff1b"] = lin(ks[8], OUT_DIM, LINEAR_STRETCH * OUT_DIM)
    p["ff2w"], p["ff2b"] = lin(ks[9], LINEAR_STRETCH * OUT_DIM, OUT_DIM)
    # layernorms (gamma=1, beta=0 like torch init)
    for name in ["ln1", "ln2", "ln3"]:
        p[name + "g"] = jnp.ones((1, OUT_DIM), DTYPE)
        p[name + "b"] = jnp.zeros((1, OUT_DIM), DTYPE)
    return p


# ------------------------------ pure-JAX reference ----------------------------
def _ref_attention(xq, xkv, wq, wk, wv, wo, bq, bk, bv, bo, causal):
    q = xq @ wq + bq
    k = xkv @ wk + bk
    v = xkv @ wv + bv
    sq, skv = xq.shape[1], xkv.shape[1]
    qh = q.reshape(q.shape[0], sq, NUM_HEADS, KQ_DIM).transpose(0, 2, 1, 3)
    kh = k.reshape(k.shape[0], skv, NUM_HEADS, KQ_DIM).transpose(0, 2, 1, 3)
    vh = v.reshape(v.shape[0], skv, NUM_HEADS, HEAD_V_DIM).transpose(0, 2, 1, 3)
    s = jnp.einsum("bhqd,bhkd->bhqk", qh, kh) / math.sqrt(KQ_DIM)
    if causal:
        mask = jnp.tril(jnp.ones((sq, skv), bool))
        s = jnp.where(mask[None, None], s, -1e30)
    pa = jax.nn.softmax(s, axis=-1)
    o = jnp.einsum("bhqk,bhkd->bhqd", pa, vh)
    o = o.transpose(0, 2, 1, 3).reshape(o.shape[0], sq, OUT_DIM)
    return o @ wo + bo


def _ref_ln(x, g, b):
    mu = x.mean(-1, keepdims=True)
    var = ((x - mu) ** 2).mean(-1, keepdims=True)
    return (x - mu) / jnp.sqrt(var + LN_EPS) * g + b


def decoder_layer_ref(x, e, p):
    y = _ref_attention(x, x, p["wq"], p["wk"], p["wv"], p["wo"],
                       p["bq"], p["bk"], p["bv"], p["bo"], True)
    y = _ref_ln(y + x, p["ln1g"], p["ln1b"])
    z = _ref_attention(y, e, p["cwq"], p["cwk"], p["cwv"], p["cwo"],
                       p["cbq"], p["cbk"], p["cbv"], p["cbo"], False)
    z = _ref_ln(z + y, p["ln2g"], p["ln2b"])
    w = jnp.maximum(z @ p["ff1w"] + p["ff1b"], 0.0) @ p["ff2w"] + p["ff2b"]
    return _ref_ln(w + z, p["ln3g"], p["ln3b"])


# ---------------------------------- main --------------------------------------
if __name__ == "__main__":
    key = jax.random.PRNGKey(0)
    kx, ke, kp = jax.random.split(key, 3)
    x = jax.random.normal(kx, (B, S_DEC, DEC_INP_DIM), DTYPE)
    e = jax.random.normal(ke, (B, S_ENC, ENC_INP_DIM), DTYPE)
    params = make_params(kp)

    out = jax.block_until_ready(decoder_layer(x, e, params))
    ref = jax.block_until_ready(decoder_layer_ref(x, e, params))

    assert out.shape == (B, S_DEC, OUT_DIM)
    # Tolerance accounts for the (mathematically exact) per-head V@Wo weight
    # fusion / scale folding reassociation; softmax denominator is exact now.
    assert jnp.allclose(out, ref, rtol=1e-2, atol=1e-2), "mismatch vs reference"

    print("KERNEL_OK")
</pallas_src>

<mosaic_0001>
module attributes {stable_mosaic.version = 11 : i64} {
  func.func @decoder_layer_kernel(%arg0: memref<40x32xf32, #tpu.memory_space<vmem>>, %arg1: memref<32x512xf32, #tpu.memory_space<vmem>>, %arg2: memref<32x128xf32, #tpu.memory_space<vmem>>, %arg3: memref<128x32xf32, #tpu.memory_space<vmem>>, %arg4: memref<32x512xf32, #tpu.memory_space<vmem>>, %arg5: memref<16x32xf32, #tpu.memory_space<vmem>>) attributes {dimension_semantics = [], scalar_prefetch = 0 : i64, scratch_operands = 0 : i64, tpu.core_type = #tpu.core_type<tc>} {
    %c0 = arith.constant 0 : index
    %c0_0 = arith.constant 0 : index
    %0 = vector.load %arg0[%c0, %c0_0] : memref<40x32xf32, #tpu.memory_space<vmem>>, vector<40x32xf32>
    %c0_1 = arith.constant 0 : index
    %c0_2 = arith.constant 0 : index
    %1 = vector.load %arg4[%c0_1, %c0_2] : memref<32x512xf32, #tpu.memory_space<vmem>>, vector<32x512xf32>
    %2 = vector.extract_strided_slice %1 {offsets = [0, 0], sizes = [1, 512], strides = [1, 1]} : vector<32x512xf32> to vector<1x512xf32>
    %3 = vector.extract_strided_slice %1 {offsets = [1, 0], sizes = [1, 128], strides = [1, 1]} : vector<32x512xf32> to vector<1x128xf32>
    %4 = vector.extract_strided_slice %1 {offsets = [2, 0], sizes = [1, 32], strides = [1, 1]} : vector<32x512xf32> to vector<1x32xf32>
    %5 = vector.extract_strided_slice %1 {offsets = [3, 0], sizes = [1, 32], strides = [1, 1]} : vector<32x512xf32> to vector<1x32xf32>
    %6 = vector.extract_strided_slice %1 {offsets = [4, 0], sizes = [1, 32], strides = [1, 1]} : vector<32x512xf32> to vector<1x32xf32>
    %7 = vector.extract_strided_slice %1 {offsets = [5, 0], sizes = [1, 32], strides = [1, 1]} : vector<32x512xf32> to vector<1x32xf32>
    %8 = vector.extract_strided_slice %1 {offsets = [6, 0], sizes = [1, 32], strides = [1, 1]} : vector<32x512xf32> to vector<1x32xf32>
    %9 = vector.extract_strided_slice %1 {offsets = [7, 0], sizes = [1, 32], strides = [1, 1]} : vector<32x512xf32> to vector<1x32xf32>
    %10 = vector.extract_strided_slice %1 {offsets = [8, 0], sizes = [1, 32], strides = [1, 1]} : vector<32x512xf32> to vector<1x32xf32>
    %11 = vector.extract_strided_slice %1 {offsets = [9, 0], sizes = [1, 32], strides = [1, 1]} : vector<32x512xf32> to vector<1x32xf32>
    %12 = vector.extract_strided_slice %1 {offsets = [10, 0], sizes = [1, 32], strides = [1, 1]} : vector<32x512xf32> to vector<1x32xf32>
    %13 = vector.extract_strided_slice %1 {offsets = [16, 0], sizes = [16, 16], strides = [1, 1]} : vector<32x512xf32> to vector<16x16xf32>
    %14 = vector.extract_strided_slice %1 {offsets = [16, 128], sizes = [16, 20], strides = [1, 1]} : vector<32x512xf32> to vector<16x20xf32>
    %c0_3 = arith.constant 0 : index
    %c0_4 = arith.constant 0 : index
    %15 = vector.load %arg1[%c0_3, %c0_4] : memref<32x512xf32, #tpu.memory_space<vmem>>, vector<32x512xf32>
    %cst = arith.constant dense<0.000000e+00> : vector<40x512xf32>
    %16 = tpu.matmul %0, %15, %cst {dimension_numbers = #tpu.dot_dimension_numbers<[1], [0], [0], [1], [0, 0, 1, 1], [], []>} : vector<40x32xf32>, vector<32x512xf32>, vector<40x512xf32> -> vector<40x512xf32>
    %17 = vector.broadcast %2 : vector<1x512xf32> to vector<40x512xf32>
    %18 = arith.addf %16, %17 : vector<40x512xf32>
    %19 = vector.extract_strided_slice %18 {offsets = [0, 0], sizes = [16, 512], strides = [1, 1]} : vector<40x512xf32> to vector<16x512xf32>
    %20 = vector.extract_strided_slice %18 {offsets = [16, 0], sizes = [20, 512], strides = [1, 1]} : vector<40x512xf32> to vector<20x512xf32>
    %21 = vector.extract_strided_slice %0 {offsets = [0, 0], sizes = [16, 32], strides = [1, 1]} : vector<40x32xf32> to vector<16x32xf32>
    %cst_5 = arith.constant 0.000000e+00 : f32
    %22 = vector.broadcast %cst_5 : f32 to vector<16x32xf32>
    %23 = vector.extract_strided_slice %19 {offsets = [0, 0], sizes = [16, 16], strides = [1, 1]} : vector<16x512xf32> to vector<16x16xf32>
    %24 = vector.extract_strided_slice %19 {offsets = [0, 64], sizes = [16, 16], strides = [1, 1]} : vector<16x512xf32> to vector<16x16xf32>
    %cst_6 = arith.constant dense<0.000000e+00> : vector<16x16xf32>
    %25 = tpu.matmul %23, %24, %cst_6 {dimension_numbers = #tpu.dot_dimension_numbers<[1], [1], [0], [0], [0, 0, 1, 0], [], []>} : vector<16x16xf32>, vector<16x16xf32>, vector<16x16xf32> -> vector<16x16xf32>
    %26 = arith.addf %25, %13 : vector<16x16xf32>
    %cst_7 = arith.constant dense<0xFF800000> : vector<16xf32>
    %27 = vector.multi_reduction <maximumf>, %26, %cst_7 [1] : vector<16x16xf32> to vector<16xf32>
    %28 = vector.shape_cast %27 : vector<16xf32> to vector<16x1xf32>
    %29 = vector.broadcast %28 : vector<16x1xf32> to vector<16x16xf32>
    %30 = arith.subf %26, %29 : vector<16x16xf32>
    %31 = math.exp %30 : vector<16x16xf32>
    %cst_8 = arith.constant dense<0.000000e+00> : vector<16xf32>
    %32 = vector.multi_reduction <add>, %31, %cst_8 [1] : vector<16x16xf32> to vector<16xf32>
    %33 = vector.shape_cast %32 : vector<16xf32> to vector<16x1xf32>
    %34 = vector.broadcast %33 : vector<16x1xf32> to vector<16x16xf32>
    %35 = arith.divf %31, %34 : vector<16x16xf32>
    %36 = vector.extract_strided_slice %19 {offsets = [0, 128], sizes = [16, 32], strides = [1, 1]} : vector<16x512xf32> to vector<16x32xf32>
    %cst_9 = arith.constant dense<0.000000e+00> : vector<16x32xf32>
    %37 = tpu.matmul %35, %36, %cst_9 {dimension_numbers = #tpu.dot_dimension_numbers<[1], [0], [0], [1], [0, 0, 1, 1], [], []>} : vector<16x16xf32>, vector<16x32xf32>, vector<16x32xf32> -> vector<16x32xf32>
    %38 = arith.addf %22, %37 : vector<16x32xf32>
    %39 = vector.extract_strided_slice %19 {offsets = [0, 16], sizes = [16, 16], strides = [1, 1]} : vector<16x512xf32> to vector<16x16xf32>
    %40 = vector.extract_strided_slice %19 {offsets = [0, 80], sizes = [16, 16], strides = [1, 1]} : vector<16x512xf32> to vector<16x16xf32>
    %cst_10 = arith.constant dense<0.000000e+00> : vector<16x16xf32>
    %41 = tpu.matmul %39, %40, %cst_10 {dimension_numbers = #tpu.dot_dimension_numbers<[1], [1], [0], [0], [0, 0, 1, 0], [], []>} : vector<16x16xf32>, vector<16x16xf32>, vector<16x16xf32> -> vector<16x16xf32>
    %42 = arith.addf %41, %13 : vector<16x16xf32>
    %cst_11 = arith.constant dense<0xFF800000> : vector<16xf32>
    %43 = vector.multi_reduction <maximumf>, %42, %cst_11 [1] : vector<16x16xf32> to vector<16xf32>
    %44 = vector.shape_cast %43 : vector<16xf32> to vector<16x1xf32>
    %45 = vector.broadcast %44 : vector<16x1xf32> to vector<16x16xf32>
    %46 = arith.subf %42, %45 : vector<16x16xf32>
    %47 = math.exp %46 : vector<16x16xf32>
    %cst_12 = arith.constant dense<0.000000e+00> : vector<16xf32>
    %48 = vector.multi_reduction <add>, %47, %cst_12 [1] : vector<16x16xf32> to vector<16xf32>
    %49 = vector.shape_cast %48 : vector<16xf32> to vector<16x1xf32>
    %50 = vector.broadcast %49 : vector<16x1xf32> to vector<16x16xf32>
    %51 = arith.divf %47, %50 : vector<16x16xf32>
    %52 = vector.extract_strided_slice %19 {offsets = [0, 160], sizes = [16, 32], strides = [1, 1]} : vector<16x512xf32> to vector<16x32xf32>
    %cst_13 = arith.constant dense<0.000000e+00> : vector<16x32xf32>
    %53 = tpu.matmul %51, %52, %cst_13 {dimension_numbers = #tpu.dot_dimension_numbers<[1], [0], [0], [1], [0, 0, 1, 1], [], []>} : vector<16x16xf32>, vector<16x32xf32>, vector<16x32xf32> -> vector<16x32xf32>
    %54 = arith.addf %38, %53 : vector<16x32xf32>
    %55 = vector.extract_strided_slice %19 {offsets = [0, 32], sizes = [16, 16], strides = [1, 1]} : vector<16x512xf32> to vector<16x16xf32>
    %56 = vector.extract_strided_slice %19 {offsets = [0, 96], sizes = [16, 16], strides = [1, 1]} : vector<16x512xf32> to vector<16x16xf32>
    %cst_14 = arith.constant dense<0.000000e+00> : vector<16x16xf32>
    %57 = tpu.matmul %55, %56, %cst_14 {dimension_numbers = #tpu.dot_dimension_numbers<[1], [1], [0], [0], [0, 0, 1, 0], [], []>} : vector<16x16xf32>, vector<16x16xf32>, vector<16x16xf32> -> vector<16x16xf32>
    %58 = arith.addf %57, %13 : vector<16x16xf32>
    %cst_15 = arith.constant dense<0xFF800000> : vector<16xf32>
    %59 = vector.multi_reduction <maximumf>, %58, %cst_15 [1] : vector<16x16xf32> to vector<16xf32>
    %60 = vector.shape_cast %59 : vector<16xf32> to vector<16x1xf32>
    %61 = vector.broadcast %60 : vector<16x1xf32> to vector<16x16xf32>
    %62 = arith.subf %58, %61 : vector<16x16xf32>
    %63 = math.exp %62 : vector<16x16xf32>
    %cst_16 = arith.constant dense<0.000000e+00> : vector<16xf32>
    %64 = vector.multi_reduction <add>, %63, %cst_16 [1] : vector<16x16xf32> to vector<16xf32>
    %65 = vector.shape_cast %64 : vector<16xf32> to vector<16x1xf32>
    %66 = vector.broadcast %65 : vector<16x1xf32> to vector<16x16xf32>
    %67 = arith.divf %63, %66 : vector<16x16xf32>
    %68 = vector.extract_strided_slice %19 {offsets = [0, 192], sizes = [16, 32], strides = [1, 1]} : vector<16x512xf32> to vector<16x32xf32>
    %cst_17 = arith.constant dense<0.000000e+00> : vector<16x32xf32>
    %69 = tpu.matmul %67, %68, %cst_17 {dimension_numbers = #tpu.dot_dimension_numbers<[1], [0], [0], [1], [0, 0, 1, 1], [], []>} : vector<16x16xf32>, vector<16x32xf32>, vector<16x32xf32> -> vector<16x32xf32>
    %70 = arith.addf %54, %69 : vector<16x32xf32>
    %71 = vector.extract_strided_slice %19 {offsets = [0, 48], sizes = [16, 16], strides = [1, 1]} : vector<16x512xf32> to vector<16x16xf32>
    %72 = vector.extract_strided_slice %19 {offsets = [0, 112], sizes = [16, 16], strides = [1, 1]} : vector<16x512xf32> to vector<16x16xf32>
    %cst_18 = arith.constant dense<0.000000e+00> : vector<16x16xf32>
    %73 = tpu.matmul %71, %72, %cst_18 {dimension_numbers = #tpu.dot_dimension_numbers<[1], [1], [0], [0], [0, 0, 1, 0], [], []>} : vector<16x16xf32>, vector<16x16xf32>, vector<16x16xf32> -> vector<16x16xf32>
    %74 = arith.addf %73, %13 : vector<16x16xf32>
    %cst_19 = arith.constant dense<0xFF800000> : vector<16xf32>
    %75 = vector.multi_reduction <maximumf>, %74, %cst_19 [1] : vector<16x16xf32> to vector<16xf32>
    %76 = vector.shape_cast %75 : vector<16xf32> to vector<16x1xf32>
    %77 = vector.broadcast %76 : vector<16x1xf32> to vector<16x16xf32>
    %78 = arith.subf %74, %77 : vector<16x16xf32>
    %79 = math.exp %78 : vector<16x16xf32>
    %cst_20 = arith.constant dense<0.000000e+00> : vector<16xf32>
    %80 = vector.multi_reduction <add>, %79, %cst_20 [1] : vector<16x16xf32> to vector<16xf32>
    %81 = vector.shape_cast %80 : vector<16xf32> to vector<16x1xf32>
    %82 = vector.broadcast %81 : vector<16x1xf32> to vector<16x16xf32>
    %83 = arith.divf %79, %82 : vector<16x16xf32>
    %84 = vector.extract_strided_slice %19 {offsets = [0, 224], sizes = [16, 32], strides = [1, 1]} : vector<16x512xf32> to vector<16x32xf32>
    %cst_21 = arith.constant dense<0.000000e+00> : vector<16x32xf32>
    %85 = tpu.matmul %83, %84, %cst_21 {dimension_numbers = #tpu.dot_dimension_numbers<[1], [0], [0], [1], [0, 0, 1, 1], [], []>} : vector<16x16xf32>, vector<16x32xf32>, vector<16x32xf32> -> vector<16x32xf32>
    %86 = arith.addf %70, %85 : vector<16x32xf32>
    %87 = vector.broadcast %4 : vector<1x32xf32> to vector<16x32xf32>
    %88 = arith.addf %86, %87 : vector<16x32xf32>
    %89 = arith.addf %88, %21 : vector<16x32xf32>
    %cst_22 = arith.constant dense<0.000000e+00> : vector<16xf32>
    %90 = vector.multi_reduction <add>, %89, %cst_22 [1] : vector<16x32xf32> to vector<16xf32>
    %91 = vector.shape_cast %90 : vector<16xf32> to vector<16x1xf32>
    %cst_23 = arith.constant 3.200000e+01 : f32
    %92 = vector.broadcast %cst_23 : f32 to vector<16x1xf32>
    %93 = arith.divf %91, %92 : vector<16x1xf32>
    %94 = vector.broadcast %93 : vector<16x1xf32> to vector<16x32xf32>
    %95 = arith.subf %89, %94 : vector<16x32xf32>
    %96 = arith.mulf %95, %95 : vector<16x32xf32>
    %cst_24 = arith.constant dense<0.000000e+00> : vector<16xf32>
    %97 = vector.multi_reduction <add>, %96, %cst_24 [1] : vector<16x32xf32> to vector<16xf32>
    %98 = vector.shape_cast %97 : vector<16xf32> to vector<16x1xf32>
    %cst_25 = arith.constant 3.200000e+01 : f32
    %99 = vector.broadcast %cst_25 : f32 to vector<16x1xf32>
    %100 = arith.divf %98, %99 : vector<16x1xf32>
    %cst_26 = arith.constant 9.99999974E-6 : f32
    %101 = vector.broadcast %cst_26 : f32 to vector<16x1xf32>
    %102 = arith.addf %100, %101 : vector<16x1xf32>
    %103 = math.rsqrt %102 : vector<16x1xf32>
    %104 = vector.broadcast %103 : vector<16x1xf32> to vector<16x32xf32>
    %105 = arith.mulf %95, %104 : vector<16x32xf32>
    %106 = vector.broadcast %7 : vector<1x32xf32> to vector<16x32xf32>
    %107 = arith.mulf %105, %106 : vector<16x32xf32>
    %108 = vector.broadcast %8 : vector<1x32xf32> to vector<16x32xf32>
    %109 = arith.addf %107, %108 : vector<16x32xf32>
    %c0_27 = arith.constant 0 : index
    %c0_28 = arith.constant 0 : index
    %110 = vector.load %arg2[%c0_27, %c0_28] : memref<32x128xf32, #tpu.memory_space<vmem>>, vector<32x128xf32>
    %cst_29 = arith.constant dense<0.000000e+00> : vector<16x128xf32>
    %111 = tpu.matmul %109, %110, %cst_29 {dimension_numbers = #tpu.dot_dimension_numbers<[1], [0], [0], [1], [0, 0, 1, 1], [], []>} : vector<16x32xf32>, vector<32x128xf32>, vector<16x128xf32> -> vector<16x128xf32>
    %112 = vector.broadcast %3 : vector<1x128xf32> to vector<16x128xf32>
    %113 = arith.addf %111, %112 : vector<16x128xf32>
    %cst_30 = arith.constant 0.000000e+00 : f32
    %114 = vector.broadcast %cst_30 : f32 to vector<16x32xf32>
    %115 = vector.extract_strided_slice %113 {offsets = [0, 0], sizes = [16, 16], strides = [1, 1]} : vector<16x128xf32> to vector<16x16xf32>
    %116 = vector.extract_strided_slice %20 {offsets = [0, 256], sizes = [20, 16], strides = [1, 1]} : vector<20x512xf32> to vector<20x16xf32>
    %cst_31 = arith.constant dense<0.000000e+00> : vector<16x20xf32>
    %117 = tpu.matmul %115, %116, %cst_31 {dimension_numbers = #tpu.dot_dimension_numbers<[1], [1], [0], [0], [0, 0, 1, 0], [], []>} : vector<16x16xf32>, vector<20x16xf32>, vector<16x20xf32> -> vector<16x20xf32>
    %118 = arith.addf %117, %14 : vector<16x20xf32>
    %cst_32 = arith.constant dense<0xFF800000> : vector<16xf32>
    %119 = vector.multi_reduction <maximumf>, %118, %cst_32 [1] : vector<16x20xf32> to vector<16xf32>
    %120 = vector.shape_cast %119 : vector<16xf32> to vector<16x1xf32>
    %121 = vector.broadcast %120 : vector<16x1xf32> to vector<16x20xf32>
    %122 = arith.subf %118, %121 : vector<16x20xf32>
    %123 = math.exp %122 : vector<16x20xf32>
    %cst_33 = arith.constant dense<0.000000e+00> : vector<16xf32>
    %124 = vector.multi_reduction <add>, %123, %cst_33 [1] : vector<16x20xf32> to vector<16xf32>
    %125 = vector.shape_cast %124 : vector<16xf32> to vector<16x1xf32>
    %126 = vector.broadcast %125 : vector<16x1xf32> to vector<16x20xf32>
    %127 = arith.divf %123, %126 : vector<16x20xf32>
    %128 = vector.extract_strided_slice %20 {offsets = [0, 320], sizes = [20, 32], strides = [1, 1]} : vector<20x512xf32> to vector<20x32xf32>
    %cst_34 = arith.constant dense<0.000000e+00> : vector<16x32xf32>
    %129 = tpu.matmul %127, %128, %cst_34 {dimension_numbers = #tpu.dot_dimension_numbers<[1], [0], [0], [1], [0, 0, 1, 1], [], []>} : vector<16x20xf32>, vector<20x32xf32>, vector<16x32xf32> -> vector<16x32xf32>
    %130 = arith.addf %114, %129 : vector<16x32xf32>
    %131 = vector.extract_strided_slice %113 {offsets = [0, 16], sizes = [16, 16], strides = [1, 1]} : vector<16x128xf32> to vector<16x16xf32>
    %132 = vector.extract_strided_slice %20 {offsets = [0, 272], sizes = [20, 16], strides = [1, 1]} : vector<20x512xf32> to vector<20x16xf32>
    %cst_35 = arith.constant dense<0.000000e+00> : vector<16x20xf32>
    %133 = tpu.matmul %131, %132, %cst_35 {dimension_numbers = #tpu.dot_dimension_numbers<[1], [1], [0], [0], [0, 0, 1, 0], [], []>} : vector<16x16xf32>, vector<20x16xf32>, vector<16x20xf32> -> vector<16x20xf32>
    %134 = arith.addf %133, %14 : vector<16x20xf32>
    %cst_36 = arith.constant dense<0xFF800000> : vector<16xf32>
    %135 = vector.multi_reduction <maximumf>, %134, %cst_36 [1] : vector<16x20xf32> to vector<16xf32>
    %136 = vector.shape_cast %135 : vector<16xf32> to vector<16x1xf32>
    %137 = vector.broadcast %136 : vector<16x1xf32> to vector<16x20xf32>
    %138 = arith.subf %134, %137 : vector<16x20xf32>
    %139 = math.exp %138 : vector<16x20xf32>
    %cst_37 = arith.constant dense<0.000000e+00> : vector<16xf32>
    %140 = vector.multi_reduction <add>, %139, %cst_37 [1] : vector<16x20xf32> to vector<16xf32>
    %141 = vector.shape_cast %140 : vector<16xf32> to vector<16x1xf32>
    %142 = vector.broadcast %141 : vector<16x1xf32> to vector<16x20xf32>
    %143 = arith.divf %139, %142 : vector<16x20xf32>
    %144 = vector.extract_strided_slice %20 {offsets = [0, 352], sizes = [20, 32], strides = [1, 1]} : vector<20x512xf32> to vector<20x32xf32>
    %cst_38 = arith.constant dense<0.000000e+00> : vector<16x32xf32>
    %145 = tpu.matmul %143, %144, %cst_38 {dimension_numbers = #tpu.dot_dimension_numbers<[1], [0], [0], [1], [0, 0, 1, 1], [], []>} : vector<16x20xf32>, vector<20x32xf32>, vector<16x32xf32> -> vector<16x32xf32>
    %146 = arith.addf %130, %145 : vector<16x32xf32>
    %147 = vector.extract_strided_slice %113 {offsets = [0, 32], sizes = [16, 16], strides = [1, 1]} : vector<16x128xf32> to vector<16x16xf32>
    %148 = vector.extract_strided_slice %20 {offsets = [0, 288], sizes = [20, 16], strides = [1, 1]} : vector<20x512xf32> to vector<20x16xf32>
    %cst_39 = arith.constant dense<0.000000e+00> : vector<16x20xf32>
    %149 = tpu.matmul %147, %148, %cst_39 {dimension_numbers = #tpu.dot_dimension_numbers<[1], [1], [0], [0], [0, 0, 1, 0], [], []>} : vector<16x16xf32>, vector<20x16xf32>, vector<16x20xf32> -> vector<16x20xf32>
    %150 = arith.addf %149, %14 : vector<16x20xf32>
    %cst_40 = arith.constant dense<0xFF800000> : vector<16xf32>
    %151 = vector.multi_reduction <maximumf>, %150, %cst_40 [1] : vector<16x20xf32> to vector<16xf32>
    %152 = vector.shape_cast %151 : vector<16xf32> to vector<16x1xf32>
    %153 = vector.broadcast %152 : vector<16x1xf32> to vector<16x20xf32>
    %154 = arith.subf %150, %153 : vector<16x20xf32>
    %155 = math.exp %154 : vector<16x20xf32>
    %cst_41 = arith.constant dense<0.000000e+00> : vector<16xf32>
    %156 = vector.multi_reduction <add>, %155, %cst_41 [1] : vector<16x20xf32> to vector<16xf32>
    %157 = vector.shape_cast %156 : vector<16xf32> to vector<16x1xf32>
    %158 = vector.broadcast %157 : vector<16x1xf32> to vector<16x20xf32>
    %159 = arith.divf %155, %158 : vector<16x20xf32>
    %160 = vector.extract_strided_slice %20 {offsets = [0, 384], sizes = [20, 32], strides = [1, 1]} : vector<20x512xf32> to vector<20x32xf32>
    %cst_42 = arith.constant dense<0.000000e+00> : vector<16x32xf32>
    %161 = tpu.matmul %159, %160, %cst_42 {dimension_numbers = #tpu.dot_dimension_numbers<[1], [0], [0], [1], [0, 0, 1, 1], [], []>} : vector<16x20xf32>, vector<20x32xf32>, vector<16x32xf32> -> vector<16x32xf32>
    %162 = arith.addf %146, %161 : vector<16x32xf32>
    %163 = vector.extract_strided_slice %113 {offsets = [0, 48], sizes = [16, 16], strides = [1, 1]} : vector<16x128xf32> to vector<16x16xf32>
    %164 = vector.extract_strided_slice %20 {offsets = [0, 304], sizes = [20, 16], strides = [1, 1]} : vector<20x512xf32> to vector<20x16xf32>
    %cst_43 = arith.constant dense<0.000000e+00> : vector<16x20xf32>
    %165 = tpu.matmul %163, %164, %cst_43 {dimension_numbers = #tpu.dot_dimension_numbers<[1], [1], [0], [0], [0, 0, 1, 0], [], []>} : vector<16x16xf32>, vector<20x16xf32>, vector<16x20xf32> -> vector<16x20xf32>
    %166 = arith.addf %165, %14 : vector<16x20xf32>
    %cst_44 = arith.constant dense<0xFF800000> : vector<16xf32>
    %167 = vector.multi_reduction <maximumf>, %166, %cst_44 [1] : vector<16x20xf32> to vector<16xf32>
    %168 = vector.shape_cast %167 : vector<16xf32> to vector<16x1xf32>
    %169 = vector.broadcast %168 : vector<16x1xf32> to vector<16x20xf32>
    %170 = arith.subf %166, %169 : vector<16x20xf32>
    %171 = math.exp %170 : vector<16x20xf32>
    %cst_45 = arith.constant dense<0.000000e+00> : vector<16xf32>
    %172 = vector.multi_reduction <add>, %171, %cst_45 [1] : vector<16x20xf32> to vector<16xf32>
    %173 = vector.shape_cast %172 : vector<16xf32> to vector<16x1xf32>
    %174 = vector.broadcast %173 : vector<16x1xf32> to vector<16x20xf32>
    %175 = arith.divf %171, %174 : vector<16x20xf32>
    %176 = vector.extract_strided_slice %20 {offsets = [0, 416], sizes = [20, 32], strides = [1, 1]} : vector<20x512xf32> to vector<20x32xf32>
    %cst_46 = arith.constant dense<0.000000e+00> : vector<16x32xf32>
    %177 = tpu.matmul %175, %176, %cst_46 {dimension_numbers = #tpu.dot_dimension_numbers<[1], [0], [0], [1], [0, 0, 1, 1], [], []>} : vector<16x20xf32>, vector<20x32xf32>, vector<16x32xf32> -> vector<16x32xf32>
    %178 = arith.addf %162, %177 : vector<16x32xf32>
    %179 = vector.broadcast %5 : vector<1x32xf32> to vector<16x32xf32>
    %180 = arith.addf %178, %179 : vector<16x32xf32>
    %181 = arith.addf %180, %109 : vector<16x32xf32>
    %cst_47 = arith.constant dense<0.000000e+00> : vector<16xf32>
    %182 = vector.multi_reduction <add>, %181, %cst_47 [1] : vector<16x32xf32> to vector<16xf32>
    %183 = vector.shape_cast %182 : vector<16xf32> to vector<16x1xf32>
    %cst_48 = arith.constant 3.200000e+01 : f32
    %184 = vector.broadcast %cst_48 : f32 to vector<16x1xf32>
    %185 = arith.divf %183, %184 : vector<16x1xf32>
    %186 = vector.broadcast %185 : vector<16x1xf32> to vector<16x32xf32>
    %187 = arith.subf %181, %186 : vector<16x32xf32>
    %188 = arith.mulf %187, %187 : vector<16x32xf32>
    %cst_49 = arith.constant dense<0.000000e+00> : vector<16xf32>
    %189 = vector.multi_reduction <add>, %188, %cst_49 [1] : vector<16x32xf32> to vector<16xf32>
    %190 = vector.shape_cast %189 : vector<16xf32> to vector<16x1xf32>
    %cst_50 = arith.constant 3.200000e+01 : f32
    %191 = vector.broadcast %cst_50 : f32 to vector<16x1xf32>
    %192 = arith.divf %190, %191 : vector<16x1xf32>
    %cst_51 = arith.constant 9.99999974E-6 : f32
    %193 = vector.broadcast %cst_51 : f32 to vector<16x1xf32>
    %194 = arith.addf %192, %193 : vector<16x1xf32>
    %195 = math.rsqrt %194 : vector<16x1xf32>
    %196 = vector.broadcast %195 : vector<16x1xf32> to vector<16x32xf32>
    %197 = arith.mulf %187, %196 : vector<16x32xf32>
    %198 = vector.broadcast %9 : vector<1x32xf32> to vector<16x32xf32>
    %199 = arith.mulf %197, %198 : vector<16x32xf32>
    %200 = vector.broadcast %10 : vector<1x32xf32> to vector<16x32xf32>
    %201 = arith.addf %199, %200 : vector<16x32xf32>
    %c0_52 = arith.constant 0 : index
    %c0_53 = arith.constant 0 : index
    %202 = vector.load %arg2[%c0_52, %c0_53] : memref<32x128xf32, #tpu.memory_space<vmem>>, vector<32x128xf32>
    %cst_54 = arith.constant dense<0.000000e+00> : vector<16x128xf32>
    %203 = tpu.matmul %201, %202, %cst_54 {dimension_numbers = #tpu.dot_dimension_numbers<[1], [0], [0], [1], [0, 0, 1, 1], [], []>} : vector<16x32xf32>, vector<32x128xf32>, vector<16x128xf32> -> vector<16x128xf32>
    %204 = vector.broadcast %3 : vector<1x128xf32> to vector<16x128xf32>
    %205 = arith.addf %203, %204 : vector<16x128xf32>
    %cst_55 = arith.constant 0.000000e+00 : f32
    %206 = vector.broadcast %cst_55 : f32 to vector<16x128xf32>
    %207 = arith.maximumf %205, %206 : vector<16x128xf32>
    %c0_56 = arith.constant 0 : index
    %c0_57 = arith.constant 0 : index
    %208 = vector.load %arg3[%c0_56, %c0_57] : memref<128x32xf32, #tpu.memory_space<vmem>>, vector<128x32xf32>
    %cst_58 = arith.constant dense<0.000000e+00> : vector<16x32xf32>
    %209 = tpu.matmul %207, %208, %cst_58 {dimension_numbers = #tpu.dot_dimension_numbers<[1], [0], [0], [1], [0, 0, 1, 1], [], []>} : vector<16x128xf32>, vector<128x32xf32>, vector<16x32xf32> -> vector<16x32xf32>
    %210 = vector.broadcast %6 : vector<1x32xf32> to vector<16x32xf32>
    %211 = arith.addf %209, %210 : vector<16x32xf32>
    %212 = arith.addf %211, %201 : vector<16x32xf32>
    %cst_59 = arith.constant dense<0.000000e+00> : vector<16xf32>
    %213 = vector.multi_reduction <add>, %212, %cst_59 [1] : vector<16x32xf32> to vector<16xf32>
    %214 = vector.shape_cast %213 : vector<16xf32> to vector<16x1xf32>
    %cst_60 = arith.constant 3.200000e+01 : f32
    %215 = vector.broadcast %cst_60 : f32 to vector<16x1xf32>
    %216 = arith.divf %214, %215 : vector<16x1xf32>
    %217 = vector.broadcast %216 : vector<16x1xf32> to vector<16x32xf32>
    %218 = arith.subf %212, %217 : vector<16x32xf32>
    %219 = arith.mulf %218, %218 : vector<16x32xf32>
    %cst_61 = arith.constant dense<0.000000e+00> : vector<16xf32>
    %220 = vector.multi_reduction <add>, %219, %cst_61 [1] : vector<16x32xf32> to vector<16xf32>
    %221 = vector.shape_cast %220 : vector<16xf32> to vector<16x1xf32>
    %cst_62 = arith.constant 3.200000e+01 : f32
    %222 = vector.broadcast %cst_62 : f32 to vector<16x1xf32>
    %223 = arith.divf %221, %222 : vector<16x1xf32>
    %cst_63 = arith.constant 9.99999974E-6 : f32
    %224 = vector.broadcast %cst_63 : f32 to vector<16x1xf32>
    %225 = arith.addf %223, %224 : vector<16x1xf32>
    %226 = math.rsqrt %225 : vector<16x1xf32>
    %227 = vector.broadcast %226 : vector<16x1xf32> to vector<16x32xf32>
    %228 = arith.mulf %218, %227 : vector<16x32xf32>
    %229 = vector.broadcast %11 : vector<1x32xf32> to vector<16x32xf32>
    %230 = arith.mulf %228, %229 : vector<16x32xf32>
    %231 = vector.broadcast %12 : vector<1x32xf32> to vector<16x32xf32>
    %232 = arith.addf %230, %231 : vector<16x32xf32>
    %c0_64 = arith.constant 0 : index
    %c0_65 = arith.constant 0 : index
    %233 = vector.load %arg5[%c0_64, %c0_65] : memref<16x32xf32, #tpu.memory_space<vmem>>, vector<16x32xf32>
    tpu.vector_store %arg5[%c0_64, %c0_65], %232 {strides = array<i32>} : memref<16x32xf32, #tpu.memory_space<vmem>>, vector<16x32xf32>,
    return
  }
}

</mosaic_0001>

<llo_original>
// kernel: tpu_custom_call.1
$region0: #{tpu_custom_call.1}
  #allocation0 [shape = 'u32[]', space=smem, size = 0x4, offset = 0x4, fixed_abs, tag = 'smem constant byte address 0x4 - core index']
  #allocation1 [shape = 'u32[144,128]{1,0:T(1,128)}', space=vmem, size = 0x12000, scoped, tag = 'internal scratch']
  %s0 = inlined_call_operand.vmem [shape: f32[40,32], index: 0, kind: input, shape index: {}]
  %s1 = inlined_call_operand.vmem [shape: f32[32,512], index: 1, kind: input, shape index: {}]
  %s2 = inlined_call_operand.vmem [shape: f32[32,128], index: 2, kind: input, shape index: {}]
  %s3 = inlined_call_operand.vmem [shape: f32[128,32], index: 3, kind: input, shape index: {}]
  %s4 = inlined_call_operand.hbm [shape: f32[32,512], index: 4, kind: input, shape index: {}]
  %s5 = inlined_call_operand.hbm [shape: f32[16,32], index: 5, kind: output, shape index: {}]
  %s6 = sld [smem:[#allocation0]]
  $region34: #{tpu_custom_call.1} parent=0
    _
  %s8 = ssub.s32 1, %s6
  %s9 = scalar_select 0, %s8, %s6
  $region1: #{tpu_custom_call.1} parent=0
    #allocation2 [shape = 'u8[65536]{0}', space=vmem, size = 0x10000, scoped, tag = 'input window, operand 4, single buffered']
    #allocation3 [shape = 's32[1]{0}', space=sflag, size = 0x4, scoped, tag = 'scoped memory for tpu_custom_call.1']
    #allocation4 [shape = 's32[1]{0}', space=sflag, size = 0x4, scoped, tag = 'scoped memory for tpu_custom_call.1']
    #allocation5 [shape = 'u8[8192]{0}', space=vmem, size = 0x2000, scoped, tag = 'output window, operand 0, single buffered']
    %10 = vsyncpa [#allocation3], 0
    %11 = vsyncpa [#allocation4], 0
    // Predicated region
    $region2: #{tpu_custom_call.1} parent=1 // pred_check
      _
    $region3: #{tpu_custom_call.1} parent=1 // pred_check_branch
      %13 = sbr.rel (0) target = $region5
    $region4: #{tpu_custom_call.1} parent=1 // pred_region
      _
    $region5: #{tpu_custom_call.1} parent=1 // pred_fallthru
      _
    // Predicated region
    $region6: #{tpu_custom_call.1} parent=1 // pred_check
      _
    $region7: #{tpu_custom_call.1} parent=1 // pred_check_branch
      %15 = sbr.rel (0) target = $region9
    $region8: #{tpu_custom_call.1} parent=1 // pred_region
      _
    $region9: #{tpu_custom_call.1} parent=1 // pred_fallthru
      _
    // Predicated region
    $region10: #{tpu_custom_call.1} parent=1 // pred_check
      _
    $region11: #{tpu_custom_call.1} parent=1 // pred_check_branch
      %17 = sbr.rel (0) target = $region13
    $region12: #{tpu_custom_call.1} parent=1 // pred_region
      _
    $region13: #{tpu_custom_call.1} parent=1 // pred_fallthru
      _
    // Predicated region
    $region14: #{tpu_custom_call.1} parent=1 // pred_check
      _
    $region15: #{tpu_custom_call.1} parent=1 // pred_check_branch
      %19 = sbr.rel (0) target = $region17
    $region16: #{tpu_custom_call.1} parent=1 // pred_region
      _
    $region17: #{tpu_custom_call.1} parent=1 // pred_fallthru
      _
    // Predicated region
    $region18: #{tpu_custom_call.1} parent=1 // pred_check
      _
    $region19: #{tpu_custom_call.1} parent=1 // pred_check_branch
      %21 = sbr.rel (0) target = $region21
    $region20: #{tpu_custom_call.1} parent=1 // pred_region
      %s23 = ssub.s32 2048, 2048
      %24 = vsyncadd [#allocation3], %s23
      %s25 = sshll.u32 [#allocation2], 4
      %s26 = int_to_ptr.vmem [resolvable:$true] %s25
      %31 = dma.hbm_to_vmem [thread:$0]  %s4, 2048, %s26, [#allocation3], 512, 512, 32
    $region21: #{tpu_custom_call.1} parent=1 // pred_fallthru
      _
    // Predicated region
    $region22: #{tpu_custom_call.1} parent=1 // pred_check
      _
    $region23: #{tpu_custom_call.1} parent=1 // pred_check_branch
      %33 = sbr.rel (0) target = $region25
    $region24: #{tpu_custom_call.1} parent=1 // pred_region
      %34 = dma.done [#allocation3], 2048
    $region25: #{tpu_custom_call.1} parent=1 // pred_fallthru
      _
    %v35 = vld [vmem:[%s0] sm:$0xff]
    %v36 = vld [vmem:[%s0 + $0x8] sm:$0xff]
    %v37 = vld [vmem:[%s0 + $0x10] sm:$0xff]
    %v38 = vld [vmem:[%s0 + $0x18] sm:$0xff]
    %v39 = vld [vmem:[%s0 + $0x20] sm:$0xff]
    %v40 = vld [vmem:[#allocation2] sm:$0xff]
    %v41 = vld [vmem:[#allocation2 + $0x8] sm:$0xff]
    %v42 = vld [vmem:[#allocation2 + $0x10] sm:$0xff]
    %v43 = vld [vmem:[#allocation2 + $0x18] sm:$0xff]
    %v44 = vld [vmem:[#allocation2 + $0x20] sm:$0xff]
    %v45 = vld [vmem:[#allocation2 + $0x40] sm:$0xff]
    %v46 = vld [vmem:[#allocation2 + $0x48] sm:$0xff]
    %v47 = vld [vmem:[#allocation2 + $0x60] sm:$0xff]
    %v48 = vld [vmem:[#allocation2 + $0x68] sm:$0xff]
    %v49 = vld [vmem:[%s1] sm:$0xff]
    %v50 = vld [vmem:[%s1 + $0x8] sm:$0xff]
    %v51 = vld [vmem:[%s1 + $0x10] sm:$0xff]
    %v52 = vld [vmem:[%s1 + $0x18] sm:$0xff]
    %v53 = vld [vmem:[%s1 + $0x20] sm:$0xff]
    %v54 = vld [vmem:[%s1 + $0x28] sm:$0xff]
    %v55 = vld [vmem:[%s1 + $0x30] sm:$0xff]
    %v56 = vld [vmem:[%s1 + $0x38] sm:$0xff]
    %v57 = vld [vmem:[%s1 + $0x40] sm:$0xff]
    %v58 = vld [vmem:[%s1 + $0x48] sm:$0xff]
    %v59 = vld [vmem:[%s1 + $0x50] sm:$0xff]
    %v60 = vld [vmem:[%s1 + $0x58] sm:$0xff]
    %v61 = vld [vmem:[%s1 + $0x60] sm:$0xff]
    %v62 = vld [vmem:[%s1 + $0x68] sm:$0xff]
    %v63 = vld [vmem:[%s1 + $0x70] sm:$0xff]
    %v64 = vld [vmem:[%s1 + $0x78] sm:$0xff]
    %v65 = vlaneseq
    %v66 = vshrl.u32 %v65, 7
    %v67 = vsub.s32 0, %v66
    %v68 = vrot.slane %v40, %v67
    %v69 = vlaneseq
    %v70 = vshrl.u32 %v69, 7
    %v71 = vsub.s32 0, %v70
    %v72 = vrot.slane %v41, %v71
    %v73 = vlaneseq
    %v74 = vshrl.u32 %v73, 7
    %v75 = vsub.s32 0, %v74
    %v76 = vrot.slane %v42, %v75
    %v77 = vlaneseq
    %v78 = vshrl.u32 %v77, 7
    %v79 = vsub.s32 0, %v78
    %v80 = vrot.slane %v43, %v79
    %vm81 = vcmask 261120
    %v83 = vsel %vm81, %v35, 0
    %v86 = vsel %vm81, %v36, 0
    %v89 = vsel %vm81, %v37, 0
    %v92 = vsel %vm81, %v38, 0
    %v95 = vsel %vm81, %v39, 0
    %97 = vmatprep.subr.mxu0 %v50
    %98 = vmatpush1.msra.mxu0 %v49
    %99 = vmatprep.subr.mxu0 %v54
    %100 = vmatpush1.msra.mxu0 %v53
    %101 = vmatprep.subr.mxu0 %v58
    %102 = vmatpush1.msra.mxu0 %v57
    %103 = vmatprep.subr.mxu0 %v62
    %104 = vmatpush1.msra.mxu0 %v61
    %105 = vmatprep.subr.mxu0 0.0
    %106 = vmatpush1.msra.mxu0 0.0
    %107 = vmatprep.subr.mxu0 0.0
    %108 = vmatpush1.msra.mxu0 0.0
    %109 = vmatprep.subr.mxu0 0.0
    %110 = vmatpush1.msra.mxu0 0.0
    %111 = vmatprep.subr.mxu0 0.0
    %112 = vmatpush1.msra.mxu0 0.0
    %113 = vmatprep.subr.mxu0 0.0
    %114 = vmatpush1.msra.mxu0 0.0
    %115 = vmatprep.subr.mxu0 0.0
    %116 = vmatpush1.msra.mxu0 0.0
    %117 = vmatprep.subr.mxu0 0.0
    %118 = vmatpush1.msra.mxu0 0.0
    %119 = vmatprep.subr.mxu0 0.0
    %120 = vmatpush1.msra.mxu0 0.0
    %121 = vmatprep.subr.mxu0 0.0
    %122 = vmatpush1.msra.mxu0 0.0
    %123 = vmatprep.subr.mxu0 0.0
    %124 = vmatpush1.msra.mxu0 0.0
    %125 = vmatprep.subr.mxu0 0.0
    %126 = vmatpush1.msra.mxu0 0.0
    %127 = vmatprep.subr.mxu0 0.0
    %128 = vmatpush1.msra.mxu0 0.0
    %129 = vmatprep.subr.mxu0 0.0
    %130 = vmatpush1.msra.mxu0 0.0
    %131 = vmatprep.subr.mxu0 0.0
    %132 = vmatpush1.msra.mxu0 0.0
    %133 = vmatprep.subr.mxu0 0.0
    %134 = vmatpush1.msra.mxu0 0.0
    %135 = vmatprep.subr.mxu0 0.0
    %136 = vmatpush1.msra.mxu0 0.0
    %137 = vmatprep.subr.mxu0 0.0
    %138 = vmatpush1.msra.mxu0 0.0
    %139 = vmatprep.subr.mxu0 0.0
    %140 = vmatpush1.msra.mxu0 0.0
    %141 = vmatprep.subr.mxu0 0.0
    %142 = vmatpush1.msra.mxu0 0.0
    %143 = vmatprep.subr.mxu0 0.0
    %144 = vmatpush1.msra.mxu0 0.0
    %145 = vmatprep.subr.mxu0 0.0
    %146 = vmatpush1.msra.mxu0 0.0
    %147 = vmatprep.subr.mxu0 0.0
    %148 = vmatpush1.msra.mxu0 0.0
    %149 = vmatprep.subr.mxu0 0.0
    %150 = vmatpush1.msra.mxu0 0.0
    %151 = vmatprep.subr.mxu0 0.0
    %152 = vmatpush1.msra.mxu0 0.0
    %153 = vmatprep.subr.mxu0 0.0
    %154 = vmatpush1.msra.mxu0 0.0
    %155 = vmatprep.subr.mxu0 0.0
    %156 = vmatpush1.msra.mxu0 0.0
    %157 = vmatprep.subr.mxu0 0.0
    %158 = vmatpush1.msra.mxu0 0.0
    %159 = vmatprep.subr.mxu0 0.0
    %160 = vmatpush1.msra.mxu0 0.0
    %161 = vmatprep.mubr.f32.mxu0 0.0
    %162 = vmatmul.mubr.f32.gmra.mrb[0].mxu0 %v83
    %v163 = vpop.f32.mrb[0].mxu0
    %v164 = vadd.f32 %v68, %v163
    %v165 = vpop.f32.mrb[0].mxu0
    %v166 = vadd.f32 %v72, %v165
    %167 = vmatprep.mubr.f32.mxu0 0.0
    %168 = vmatmul.mubr.f32.gmra.mrb[0].mxu0 %v86
    %v169 = vpop.f32.mrb[0].mxu0
    %v170 = vadd.f32 %v68, %v169
    %v171 = vpop.f32.mrb[0].mxu0
    %v172 = vadd.f32 %v72, %v171
    %173 = vmatprep.mubr.f32.mxu0 0.0
    %174 = vmatmul.mubr.f32.gmra.mrb[0].mxu0 %v89
    %v175 = vpop.f32.mrb[0].mxu0
    %v176 = vpop.f32.mrb[0].mxu0
    %177 = vmatprep.mubr.f32.mxu0 0.0
    %178 = vmatmul.mubr.f32.gmra.mrb[0].mxu0 %v92
    %v179 = vpop.f32.mrb[0].mxu0
    %v180 = vpop.f32.mrb[0].mxu0
    %181 = vmatprep.mubr.f32.mxu0 0.0
    %182 = vmatmul.mubr.f32.gmra.mrb[0].mxu0 %v95
    %v183 = vpop.f32.mrb[0].mxu0
    %v184 = vpop.f32.mrb[0].mxu0
    %185 = vdwg.mxu0
    %186 = vmatprep.subr.mxu0 %v52
    %187 = vmatpush1.msra.mxu0 %v51
    %188 = vmatprep.subr.mxu0 %v56
    %189 = vmatpush1.msra.mxu0 %v55
    %190 = vmatprep.subr.mxu0 %v60
    %191 = vmatpush1.msra.mxu0 %v59
    %192 = vmatprep.subr.mxu0 %v64
    %193 = vmatpush1.msra.mxu0 %v63
    %194 = vmatprep.subr.mxu0 0.0
    %195 = vmatpush1.msra.mxu0 0.0
    %196 = vmatprep.subr.mxu0 0.0
    %197 = vmatpush1.msra.mxu0 0.0
    %198 = vmatprep.subr.mxu0 0.0
    %199 = vmatpush1.msra.mxu0 0.0
    %200 = vmatprep.subr.mxu0 0.0
    %201 = vmatpush1.msra.mxu0 0.0
    %202 = vmatprep.subr.mxu0 0.0
    %203 = vmatpush1.msra.mxu0 0.0
    %204 = vmatprep.subr.mxu0 0.0
    %205 = vmatpush1.msra.mxu0 0.0
    %206 = vmatprep.subr.mxu0 0.0
    %207 = vmatpush1.msra.mxu0 0.0
    %208 = vmatprep.subr.mxu0 0.0
    %209 = vmatpush1.msra.mxu0 0.0
    %210 = vmatprep.subr.mxu0 0.0
    %211 = vmatpush1.msra.mxu0 0.0
    %212 = vmatprep.subr.mxu0 0.0
    %213 = vmatpush1.msra.mxu0 0.0
    %214 = vmatprep.subr.mxu0 0.0
    %215 = vmatpush1.msra.mxu0 0.0
    %216 = vmatprep.subr.mxu0 0.0
    %217 = vmatpush1.msra.mxu0 0.0
    %218 = vmatprep.subr.mxu0 0.0
    %219 = vmatpush1.msra.mxu0 0.0
    %220 = vmatprep.subr.mxu0 0.0
    %221 = vmatpush1.msra.mxu0 0.0
    %222 = vmatprep.subr.mxu0 0.0
    %223 = vmatpush1.msra.mxu0 0.0
    %224 = vmatprep.subr.mxu0 0.0
    %225 = vmatpush1.msra.mxu0 0.0
    %226 = vmatprep.subr.mxu0 0.0
    %227 = vmatpush1.msra.mxu0 0.0
    %228 = vmatprep.subr.mxu0 0.0
    %229 = vmatpush1.msra.mxu0 0.0
    %230 = vmatprep.subr.mxu0 0.0
    %231 = vmatpush1.msra.mxu0 0.0
    %232 = vmatprep.subr.mxu0 0.0
    %233 = vmatpush1.msra.mxu0 0.0
    %234 = vmatprep.subr.mxu0 0.0
    %235 = vmatpush1.msra.mxu0 0.0
    %236 = vmatprep.subr.mxu0 0.0
    %237 = vmatpush1.msra.mxu0 0.0
    %238 = vmatprep.subr.mxu0 0.0
    %239 = vmatpush1.msra.mxu0 0.0
    %240 = vmatprep.subr.mxu0 0.0
    %241 = vmatpush1.msra.mxu0 0.0
    %242 = vmatprep.subr.mxu0 0.0
    %243 = vmatpush1.msra.mxu0 0.0
    %244 = vmatprep.subr.mxu0 0.0
    %245 = vmatpush1.msra.mxu0 0.0
    %246 = vmatprep.subr.mxu0 0.0
    %247 = vmatpush1.msra.mxu0 0.0
    %248 = vmatprep.subr.mxu0 0.0
    %249 = vmatpush1.msra.mxu0 0.0
    %250 = vmatprep.mubr.f32.mxu0 0.0
    %251 = vmatmul.mubr.f32.gmra.mrb[0].mxu0 %v83
    %v252 = vpop.f32.mrb[0].mxu0
    %v253 = vpop.f32.mrb[0].mxu0
    %254 = vmatprep.mubr.f32.mxu0 0.0
    %255 = vmatmul.mubr.f32.gmra.mrb[0].mxu0 %v86
    %v256 = vpop.f32.mrb[0].mxu0
    %v257 = vpop.f32.mrb[0].mxu0
    %258 = vmatprep.mubr.f32.mxu0 0.0
    %259 = vmatmul.mubr.f32.gmra.mrb[0].mxu0 %v89
    %v260 = vpop.f32.mrb[0].mxu0
    %v261 = vadd.f32 %v76, %v260
    %v262 = vpop.f32.mrb[0].mxu0
    %v263 = vadd.f32 %v80, %v262
    %264 = vmatprep.mubr.f32.mxu0 0.0
    %265 = vmatmul.mubr.f32.gmra.mrb[0].mxu0 %v92
    %v266 = vpop.f32.mrb[0].mxu0
    %v267 = vadd.f32 %v76, %v266
    %v268 = vpop.f32.mrb[0].mxu0
    %v269 = vadd.f32 %v80, %v268
    %270 = vmatprep.mubr.f32.mxu0 0.0
    %271 = vmatmul.mubr.f32.gmra.mrb[0].mxu0 %v95
    %v272 = vpop.f32.mrb[0].mxu0
    %v273 = vadd.f32 %v76, %v272
    %v274 = vpop.f32.mrb[0].mxu0
    %v275 = vadd.f32 %v80, %v274
    %276 = vdwg.mxu0
    %279 = vrot.lane.b32.xlu0 %v164, 64
    %v280 = vpop.permute.xlu0 %279
    %281 = vrot.lane.b32.xlu0 %v170, 64
    %v282 = vpop.permute.xlu0 %281
    %vm283 = vcmask 130048
    %v284 = vsel %vm283, %v164, 0
    %v286 = vsel %vm283, %v170, 0
    %v288 = vsel %vm283, %v280, 0
    %v290 = vsel %vm283, %v282, 0
    %292 = vmatprep.subr.mxu0 0.0
    %293 = vmatpush1.xpose.msra.mxu0 %v288
    %294 = vmatprep.subr.mxu0 0.0
    %295 = vmatpush1.xpose.msra.mxu0 %v290
    %296 = vmatprep.subr.mxu0 0.0
    %297 = vmatpush1.xpose.msra.mxu0 0.0
    %298 = vmatprep.subr.mxu0 0.0
    %299 = vmatpush1.xpose.msra.mxu0 0.0
    %300 = vmatprep.subr.mxu0 0.0
    %301 = vmatpush1.xpose.msra.mxu0 0.0
    %302 = vmatprep.subr.mxu0 0.0
    %303 = vmatpush1.xpose.msra.mxu0 0.0
    %304 = vmatprep.subr.mxu0 0.0
    %305 = vmatpush1.xpose.msra.mxu0 0.0
    %306 = vmatprep.subr.mxu0 0.0
    %307 = vmatpush1.xpose.msra.mxu0 0.0
    %308 = vmatprep.subr.mxu0 0.0
    %309 = vmatpush1.xpose.msra.mxu0 0.0
    %310 = vmatprep.subr.mxu0 0.0
    %311 = vmatpush1.xpose.msra.mxu0 0.0
    %312 = vmatprep.subr.mxu0 0.0
    %313 = vmatpush1.xpose.msra.mxu0 0.0
    %314 = vmatprep.subr.mxu0 0.0
    %315 = vmatpush1.xpose.msra.mxu0 0.0
    %316 = vmatprep.subr.mxu0 0.0
    %317 = vmatpush1.xpose.msra.mxu0 0.0
    %318 = vmatprep.subr.mxu0 0.0
    %319 = vmatpush1.xpose.msra.mxu0 0.0
    %320 = vmatprep.subr.mxu0 0.0
    %321 = vmatpush1.xpose.msra.mxu0 0.0
    %322 = vmatprep.subr.mxu0 0.0
    %323 = vmatpush1.xpose.msra.mxu0 0.0
    %324 = vmatprep.subr.mxu0 0.0
    %325 = vmatpush1.xpose.msra.mxu0 0.0
    %326 = vmatprep.subr.mxu0 0.0
    %327 = vmatpush1.xpose.msra.mxu0 0.0
    %328 = vmatprep.subr.mxu0 0.0
    %329 = vmatpush1.xpose.msra.mxu0 0.0
    %330 = vmatprep.subr.mxu0 0.0
    %331 = vmatpush1.xpose.msra.mxu0 0.0
    %332 = vmatprep.subr.mxu0 0.0
    %333 = vmatpush1.xpose.msra.mxu0 0.0
    %334 = vmatprep.subr.mxu0 0.0
    %335 = vmatpush1.xpose.msra.mxu0 0.0
    %336 = vmatprep.subr.mxu0 0.0
    %337 = vmatpush1.xpose.msra.mxu0 0.0
    %338 = vmatprep.subr.mxu0 0.0
    %339 = vmatpush1.xpose.msra.mxu0 0.0
    %340 = vmatprep.subr.mxu0 0.0
    %341 = vmatpush1.xpose.msra.mxu0 0.0
    %342 = vmatprep.subr.mxu0 0.0
    %343 = vmatpush1.xpose.msra.mxu0 0.0
    %344 = vmatprep.subr.mxu0 0.0
    %345 = vmatpush1.xpose.msra.mxu0 0.0
    %346 = vmatprep.subr.mxu0 0.0
    %347 = vmatpush1.xpose.msra.mxu0 0.0
    %348 = vmatprep.subr.mxu0 0.0
    %349 = vmatpush1.xpose.msra.mxu0 0.0
    %350 = vmatprep.subr.mxu0 0.0
    %351 = vmatpush1.xpose.msra.mxu0 0.0
    %352 = vmatprep.subr.mxu0 0.0
    %353 = vmatpush1.xpose.msra.mxu0 0.0
    %354 = vmatprep.subr.mxu0 0.0
    %355 = vmatpush1.xpose.msra.mxu0 0.0
    %356 = vmatprep.mubr.f32.mxu0 0.0
    %357 = vmatmul.mubr.f32.gmra.mrb[0].mxu0 %v284
    %v358 = vpop.f32.mrb[0].mxu0
    %v359 = vadd.f32 %v45, %v358
    %v360 = vpop.f32.mrb[0].mxu0
    %361 = vmatprep.mubr.f32.mxu0 0.0
    %362 = vmatmul.mubr.f32.gmra.mrb[0].mxu0 %v286
    %v363 = vpop.f32.mrb[0].mxu0
    %v364 = vadd.f32 %v47, %v363
    %v365 = vpop.f32.mrb[0].mxu0
    %366 = vdwg.mxu0
    %v367 = vsel %vm283, %v359, -inf
    %368 = vmax.xlane.f32.xlu0 %v367
    %v369 = vpop.xlane.xlu0 %368
    %v370 = vsel %vm283, %v364, -inf
    %371 = vmax.xlane.f32.xlu0 %v370
    %v372 = vpop.xlane.xlu0 %371
    %v373 = vsub.f32 %v359, %v369
    %v374 = vsub.f32 %v364, %v372
    %v375 = vmul.f32 %v373, 1.442695
    %v376 = vpow.pop %v375
    %v377 = vmul.f32 %v374, 1.442695
    %v378 = vpow.pop %v377
    %v379 = vsel %vm283, %v376, 0.0
    %380 = vadd.xlane.f32.xlu0 %v379
    %v381 = vpop.xlane.xlu0 %380
    %v382 = vsel %vm283, %v378, 0.0
    %383 = vadd.xlane.f32.xlu0 %v382
    %v384 = vpop.xlane.xlu0 %383
    %v385 = vrcp.pop %v381
    %v386 = vmul.f32 %v376, %v385
    %v387 = vrcp.pop %v384
    %v388 = vmul.f32 %v378, %v387
    %389 = vrot.lane.b32.xlu0 %v164, 112
    %v390 = vpop.permute.xlu0 %389
    %391 = vrot.lane.b32.xlu0 %v170, 112
    %v392 = vpop.permute.xlu0 %391
    %393 = vrot.lane.b32.xlu0 %v164, 48
    %v394 = vpop.permute.xlu0 %393
    %395 = vrot.lane.b32.xlu0 %v170, 48
    %v396 = vpop.permute.xlu0 %395
    %v397 = vsel %vm283, %v390, 0
    %v399 = vsel %vm283, %v392, 0
    %v401 = vsel %vm283, %v394, 0
    %v403 = vsel %vm283, %v396, 0
    %405 = vmatprep.subr.mxu0 0.0
    %406 = vmatpush1.xpose.msra.mxu0 %v401
    %407 = vmatprep.subr.mxu0 0.0
    %408 = vmatpush1.xpose.msra.mxu0 %v403
    %409 = vmatprep.subr.mxu0 0.0
    %410 = vmatpush1.xpose.msra.mxu0 0.0
    %411 = vmatprep.subr.mxu0 0.0
    %412 = vmatpush1.xpose.msra.mxu0 0.0
    %413 = vmatprep.subr.mxu0 0.0
    %414 = vmatpush1.xpose.msra.mxu0 0.0
    %415 = vmatprep.subr.mxu0 0.0
    %416 = vmatpush1.xpose.msra.mxu0 0.0
    %417 = vmatprep.subr.mxu0 0.0
    %418 = vmatpush1.xpose.msra.mxu0 0.0
    %419 = vmatprep.subr.mxu0 0.0
    %420 = vmatpush1.xpose.msra.mxu0 0.0
    %421 = vmatprep.subr.mxu0 0.0
    %422 = vmatpush1.xpose.msra.mxu0 0.0
    %423 = vmatprep.subr.mxu0 0.0
    %424 = vmatpush1.xpose.msra.mxu0 0.0
    %425 = vmatprep.subr.mxu0 0.0
    %426 = vmatpush1.xpose.msra.mxu0 0.0
    %427 = vmatprep.subr.mxu0 0.0
    %428 = vmatpush1.xpose.msra.mxu0 0.0
    %429 = vmatprep.subr.mxu0 0.0
    %430 = vmatpush1.xpose.msra.mxu0 0.0
    %431 = vmatprep.subr.mxu0 0.0
    %432 = vmatpush1.xpose.msra.mxu0 0.0
    %433 = vmatprep.subr.mxu0 0.0
    %434 = vmatpush1.xpose.msra.mxu0 0.0
    %435 = vmatprep.subr.mxu0 0.0
    %436 = vmatpush1.xpose.msra.mxu0 0.0
    %437 = vmatprep.subr.mxu0 0.0
    %438 = vmatpush1.xpose.msra.mxu0 0.0
    %439 = vmatprep.subr.mxu0 0.0
    %440 = vmatpush1.xpose.msra.mxu0 0.0
    %441 = vmatprep.subr.mxu0 0.0
    %442 = vmatpush1.xpose.msra.mxu0 0.0
    %443 = vmatprep.subr.mxu0 0.0
    %444 = vmatpush1.xpose.msra.mxu0 0.0
    %445 = vmatprep.subr.mxu0 0.0
    %446 = vmatpush1.xpose.msra.mxu0 0.0
    %447 = vmatprep.subr.mxu0 0.0
    %448 = vmatpush1.xpose.msra.mxu0 0.0
    %449 = vmatprep.subr.mxu0 0.0
    %450 = vmatpush1.xpose.msra.mxu0 0.0
    %451 = vmatprep.subr.mxu0 0.0
    %452 = vmatpush1.xpose.msra.mxu0 0.0
    %453 = vmatprep.subr.mxu0 0.0
    %454 = vmatpush1.xpose.msra.mxu0 0.0
    %455 = vmatprep.subr.mxu0 0.0
    %456 = vmatpush1.xpose.msra.mxu0 0.0
    %457 = vmatprep.subr.mxu0 0.0
    %458 = vmatpush1.xpose.msra.mxu0 0.0
    %459 = vmatprep.subr.mxu0 0.0
    %460 = vmatpush1.xpose.msra.mxu0 0.0
    %461 = vmatprep.subr.mxu0 0.0
    %462 = vmatpush1.xpose.msra.mxu0 0.0
    %463 = vmatprep.subr.mxu0 0.0
    %464 = vmatpush1.xpose.msra.mxu0 0.0
    %465 = vmatprep.subr.mxu0 0.0
    %466 = vmatpush1.xpose.msra.mxu0 0.0
    %467 = vmatprep.subr.mxu0 0.0
    %468 = vmatpush1.xpose.msra.mxu0 0.0
    %469 = vmatprep.mubr.f32.mxu0 0.0
    %470 = vmatmul.mubr.f32.gmra.mrb[0].mxu0 %v397
    %v471 = vpop.f32.mrb[0].mxu0
    %v472 = vadd.f32 %v45, %v471
    %v473 = vpop.f32.mrb[0].mxu0
    %474 = vmatprep.mubr.f32.mxu0 0.0
    %475 = vmatmul.mubr.f32.gmra.mrb[0].mxu0 %v399
    %v476 = vpop.f32.mrb[0].mxu0
    %v477 = vadd.f32 %v47, %v476
    %v478 = vpop.f32.mrb[0].mxu0
    %479 = vdwg.mxu0
    %v480 = vsel %vm283, %v472, -inf
    %481 = vmax.xlane.f32.xlu0 %v480
    %v482 = vpop.xlane.xlu0 %481
    %v483 = vsel %vm283, %v477, -inf
    %484 = vmax.xlane.f32.xlu0 %v483
    %v485 = vpop.xlane.xlu0 %484
    %v486 = vsub.f32 %v472, %v482
    %v487 = vsub.f32 %v477, %v485
    %v488 = vmul.f32 %v486, 1.442695
    %v489 = vpow.pop %v488
    %v490 = vmul.f32 %v487, 1.442695
    %v491 = vpow.pop %v490
    %v492 = vsel %vm283, %v489, 0.0
    %493 = vadd.xlane.f32.xlu0 %v492
    %v494 = vpop.xlane.xlu0 %493
    %v495 = vsel %vm283, %v491, 0.0
    %496 = vadd.xlane.f32.xlu0 %v495
    %v497 = vpop.xlane.xlu0 %496
    %v498 = vrcp.pop %v494
    %v499 = vmul.f32 %v489, %v498
    %v500 = vrcp.pop %v497
    %v501 = vmul.f32 %v491, %v500
    %504 = vrot.lane.b32.xlu0 %v166, 96
    %v505 = vpop.permute.xlu0 %504
    %506 = vrot.lane.b32.xlu0 %v172, 96
    %v507 = vpop.permute.xlu0 %506
    %v511 = vsel %vm283, %v499, 0
    %v514 = vsel %vm283, %v501, 0
    %516 = vmatprep.subr.mxu0 0.0
    %517 = vmatpush1.msra.mxu0 %v505
    %518 = vmatprep.subr.mxu0 0.0
    %519 = vmatpush1.msra.mxu0 %v507
    %520 = vmatprep.subr.mxu0 0.0
    %521 = vmatpush1.msra.mxu0 0.0
    %522 = vmatprep.subr.mxu0 0.0
    %523 = vmatpush1.msra.mxu0 0.0
    %524 = vmatprep.subr.mxu0 0.0
    %525 = vmatpush1.msra.mxu0 0.0
    %526 = vmatprep.subr.mxu0 0.0
    %527 = vmatpush1.msra.mxu0 0.0
    %528 = vmatprep.subr.mxu0 0.0
    %529 = vmatpush1.msra.mxu0 0.0
    %530 = vmatprep.subr.mxu0 0.0
    %531 = vmatpush1.msra.mxu0 0.0
    %532 = vmatprep.subr.mxu0 0.0
    %533 = vmatpush1.msra.mxu0 0.0
    %534 = vmatprep.subr.mxu0 0.0
    %535 = vmatpush1.msra.mxu0 0.0
    %536 = vmatprep.subr.mxu0 0.0
    %537 = vmatpush1.msra.mxu0 0.0
    %538 = vmatprep.subr.mxu0 0.0
    %539 = vmatpush1.msra.mxu0 0.0
    %540 = vmatprep.subr.mxu0 0.0
    %541 = vmatpush1.msra.mxu0 0.0
    %542 = vmatprep.subr.mxu0 0.0
    %543 = vmatpush1.msra.mxu0 0.0
    %544 = vmatprep.subr.mxu0 0.0
    %545 = vmatpush1.msra.mxu0 0.0
    %546 = vmatprep.subr.mxu0 0.0
    %547 = vmatpush1.msra.mxu0 0.0
    %548 = vmatprep.subr.mxu0 0.0
    %549 = vmatpush1.msra.mxu0 0.0
    %550 = vmatprep.subr.mxu0 0.0
    %551 = vmatpush1.msra.mxu0 0.0
    %552 = vmatprep.subr.mxu0 0.0
    %553 = vmatpush1.msra.mxu0 0.0
    %554 = vmatprep.subr.mxu0 0.0
    %555 = vmatpush1.msra.mxu0 0.0
    %556 = vmatprep.subr.mxu0 0.0
    %557 = vmatpush1.msra.mxu0 0.0
    %558 = vmatprep.subr.mxu0 0.0
    %559 = vmatpush1.msra.mxu0 0.0
    %560 = vmatprep.subr.mxu0 0.0
    %561 = vmatpush1.msra.mxu0 0.0
    %562 = vmatprep.subr.mxu0 0.0
    %563 = vmatpush1.msra.mxu0 0.0
    %564 = vmatprep.subr.mxu0 0.0
    %565 = vmatpush1.msra.mxu0 0.0
    %566 = vmatprep.subr.mxu0 0.0
    %567 = vmatpush1.msra.mxu0 0.0
    %568 = vmatprep.subr.mxu0 0.0
    %569 = vmatpush1.msra.mxu0 0.0
    %570 = vmatprep.subr.mxu0 0.0
    %571 = vmatpush1.msra.mxu0 0.0
    %572 = vmatprep.subr.mxu0 0.0
    %573 = vmatpush1.msra.mxu0 0.0
    %574 = vmatprep.subr.mxu0 0.0
    %575 = vmatpush1.msra.mxu0 0.0
    %576 = vmatprep.subr.mxu0 0.0
    %577 = vmatpush1.msra.mxu0 0.0
    %578 = vmatprep.subr.mxu0 0.0
    %579 = vmatpush1.msra.mxu0 0.0
    %580 = vmatprep.mubr.f32.mxu0 0.0
    %581 = vmatmul.mubr.f32.gmra.mrb[0].mxu0 %v511
    %v582 = vpop.f32.mrb[0].mxu0
    %v583 = vadd.f32 0.0, %v582
    %v584 = vpop.f32.mrb[0].mxu0
    %585 = vmatprep.mubr.f32.mxu0 0.0
    %586 = vmatmul.mubr.f32.gmra.mrb[0].mxu0 %v514
    %v587 = vpop.f32.mrb[0].mxu0
    %v588 = vadd.f32 0.0, %v587
    %v589 = vpop.f32.mrb[0].mxu0
    %590 = vdwg.mxu0
    %v592 = vsel %vm283, %v386, 0
    %v595 = vsel %vm283, %v388, 0
    %597 = vmatprep.subr.mxu0 0.0
    %598 = vmatpush1.msra.mxu0 %v166
    %599 = vmatprep.subr.mxu0 0.0
    %600 = vmatpush1.msra.mxu0 %v172
    %601 = vmatprep.subr.mxu0 0.0
    %602 = vmatpush1.msra.mxu0 0.0
    %603 = vmatprep.subr.mxu0 0.0
    %604 = vmatpush1.msra.mxu0 0.0
    %605 = vmatprep.subr.mxu0 0.0
    %606 = vmatpush1.msra.mxu0 0.0
    %607 = vmatprep.subr.mxu0 0.0
    %608 = vmatpush1.msra.mxu0 0.0
    %609 = vmatprep.subr.mxu0 0.0
    %610 = vmatpush1.msra.mxu0 0.0
    %611 = vmatprep.subr.mxu0 0.0
    %612 = vmatpush1.msra.mxu0 0.0
    %613 = vmatprep.subr.mxu0 0.0
    %614 = vmatpush1.msra.mxu0 0.0
    %615 = vmatprep.subr.mxu0 0.0
    %616 = vmatpush1.msra.mxu0 0.0
    %617 = vmatprep.subr.mxu0 0.0
    %618 = vmatpush1.msra.mxu0 0.0
    %619 = vmatprep.subr.mxu0 0.0
    %620 = vmatpush1.msra.mxu0 0.0
    %621 = vmatprep.subr.mxu0 0.0
    %622 = vmatpush1.msra.mxu0 0.0
    %623 = vmatprep.subr.mxu0 0.0
    %624 = vmatpush1.msra.mxu0 0.0
    %625 = vmatprep.subr.mxu0 0.0
    %626 = vmatpush1.msra.mxu0 0.0
    %627 = vmatprep.subr.mxu0 0.0
    %628 = vmatpush1.msra.mxu0 0.0
    %629 = vmatprep.subr.mxu0 0.0
    %630 = vmatpush1.msra.mxu0 0.0
    %631 = vmatprep.subr.mxu0 0.0
    %632 = vmatpush1.msra.mxu0 0.0
    %633 = vmatprep.subr.mxu0 0.0
    %634 = vmatpush1.msra.mxu0 0.0
    %635 = vmatprep.subr.mxu0 0.0
    %636 = vmatpush1.msra.mxu0 0.0
    %637 = vmatprep.subr.mxu0 0.0
    %638 = vmatpush1.msra.mxu0 0.0
    %639 = vmatprep.subr.mxu0 0.0
    %640 = vmatpush1.msra.mxu0 0.0
    %641 = vmatprep.subr.mxu0 0.0
    %642 = vmatpush1.msra.mxu0 0.0
    %643 = vmatprep.subr.mxu0 0.0
    %644 = vmatpush1.msra.mxu0 0.0
    %645 = vmatprep.subr.mxu0 0.0
    %646 = vmatpush1.msra.mxu0 0.0
    %647 = vmatprep.subr.mxu0 0.0
    %648 = vmatpush1.msra.mxu0 0.0
    %649 = vmatprep.subr.mxu0 0.0
    %650 = vmatpush1.msra.mxu0 0.0
    %651 = vmatprep.subr.mxu0 0.0
    %652 = vmatpush1.msra.mxu0 0.0
    %653 = vmatprep.subr.mxu0 0.0
    %654 = vmatpush1.msra.mxu0 0.0
    %655 = vmatprep.subr.mxu0 0.0
    %656 = vmatpush1.msra.mxu0 0.0
    %657 = vmatprep.subr.mxu0 0.0
    %658 = vmatpush1.msra.mxu0 0.0
    %659 = vmatprep.subr.mxu0 0.0
    %660 = vmatpush1.msra.mxu0 0.0
    %661 = vmatprep.mubr.f32.mxu0 0.0
    %662 = vmatmul.mubr.f32.gmra.mrb[0].mxu0 %v592
    %v663 = vpop.f32.mrb[0].mxu0
    %v664 = vadd.f32 %v583, %v663
    %v665 = vpop.f32.mrb[0].mxu0
    %666 = vmatprep.mubr.f32.mxu0 0.0
    %667 = vmatmul.mubr.f32.gmra.mrb[0].mxu0 %v595
    %v668 = vpop.f32.mrb[0].mxu0
    %v669 = vadd.f32 %v588, %v668
    %v670 = vpop.f32.mrb[0].mxu0
    %671 = vdwg.mxu0
    %672 = vrot.lane.b32.xlu0 %v164, 96
    %v673 = vpop.permute.xlu0 %672
    %674 = vrot.lane.b32.xlu0 %v170, 96
    %v675 = vpop.permute.xlu0 %674
    %676 = vrot.lane.b32.xlu0 %v164, 32
    %v677 = vpop.permute.xlu0 %676
    %678 = vrot.lane.b32.xlu0 %v170, 32
    %v679 = vpop.permute.xlu0 %678
    %v680 = vsel %vm283, %v673, 0
    %v682 = vsel %vm283, %v675, 0
    %v684 = vsel %vm283, %v677, 0
    %v686 = vsel %vm283, %v679, 0
    %688 = vmatprep.subr.mxu0 0.0
    %689 = vmatpush1.xpose.msra.mxu0 %v684
    %690 = vmatprep.subr.mxu0 0.0
    %691 = vmatpush1.xpose.msra.mxu0 %v686
    %692 = vmatprep.subr.mxu0 0.0
    %693 = vmatpush1.xpose.msra.mxu0 0.0
    %694 = vmatprep.subr.mxu0 0.0
    %695 = vmatpush1.xpose.msra.mxu0 0.0
    %696 = vmatprep.subr.mxu0 0.0
    %697 = vmatpush1.xpose.msra.mxu0 0.0
    %698 = vmatprep.subr.mxu0 0.0
    %699 = vmatpush1.xpose.msra.mxu0 0.0
    %700 = vmatprep.subr.mxu0 0.0
    %701 = vmatpush1.xpose.msra.mxu0 0.0
    %702 = vmatprep.subr.mxu0 0.0
    %703 = vmatpush1.xpose.msra.mxu0 0.0
    %704 = vmatprep.subr.mxu0 0.0
    %705 = vmatpush1.xpose.msra.mxu0 0.0
    %706 = vmatprep.subr.mxu0 0.0
    %707 = vmatpush1.xpose.msra.mxu0 0.0
    %708 = vmatprep.subr.mxu0 0.0
    %709 = vmatpush1.xpose.msra.mxu0 0.0
    %710 = vmatprep.subr.mxu0 0.0
    %711 = vmatpush1.xpose.msra.mxu0 0.0
    %712 = vmatprep.subr.mxu0 0.0
    %713 = vmatpush1.xpose.msra.mxu0 0.0
    %714 = vmatprep.subr.mxu0 0.0
    %715 = vmatpush1.xpose.msra.mxu0 0.0
    %716 = vmatprep.subr.mxu0 0.0
    %717 = vmatpush1.xpose.msra.mxu0 0.0
    %718 = vmatprep.subr.mxu0 0.0
    %719 = vmatpush1.xpose.msra.mxu0 0.0
    %720 = vmatprep.subr.mxu0 0.0
    %721 = vmatpush1.xpose.msra.mxu0 0.0
    %722 = vmatprep.subr.mxu0 0.0
    %723 = vmatpush1.xpose.msra.mxu0 0.0
    %724 = vmatprep.subr.mxu0 0.0
    %725 = vmatpush1.xpose.msra.mxu0 0.0
    %726 = vmatprep.subr.mxu0 0.0
    %727 = vmatpush1.xpose.msra.mxu0 0.0
    %728 = vmatprep.subr.mxu0 0.0
    %729 = vmatpush1.xpose.msra.mxu0 0.0
    %730 = vmatprep.subr.mxu0 0.0
    %731 = vmatpush1.xpose.msra.mxu0 0.0
    %732 = vmatprep.subr.mxu0 0.0
    %733 = vmatpush1.xpose.msra.mxu0 0.0
    %734 = vmatprep.subr.mxu0 0.0
    %735 = vmatpush1.xpose.msra.mxu0 0.0
    %736 = vmatprep.subr.mxu0 0.0
    %737 = vmatpush1.xpose.msra.mxu0 0.0
    %738 = vmatprep.subr.mxu0 0.0
    %739 = vmatpush1.xpose.msra.mxu0 0.0
    %740 = vmatprep.subr.mxu0 0.0
    %741 = vmatpush1.xpose.msra.mxu0 0.0
    %742 = vmatprep.subr.mxu0 0.0
    %743 = vmatpush1.xpose.msra.mxu0 0.0
    %744 = vmatprep.subr.mxu0 0.0
    %745 = vmatpush1.xpose.msra.mxu0 0.0
    %746 = vmatprep.subr.mxu0 0.0
    %747 = vmatpush1.xpose.msra.mxu0 0.0
    %748 = vmatprep.subr.mxu0 0.0
    %749 = vmatpush1.xpose.msra.mxu0 0.0
    %750 = vmatprep.subr.mxu0 0.0
    %751 = vmatpush1.xpose.msra.mxu0 0.0
    %752 = vmatprep.mubr.f32.mxu0 0.0
    %753 = vmatmul.mubr.f32.gmra.mrb[0].mxu0 %v680
    %v754 = vpop.f32.mrb[0].mxu0
    %v755 = vadd.f32 %v45, %v754
    %v756 = vpop.f32.mrb[0].mxu0
    %757 = vmatprep.mubr.f32.mxu0 0.0
    %758 = vmatmul.mubr.f32.gmra.mrb[0].mxu0 %v682
    %v759 = vpop.f32.mrb[0].mxu0
    %v760 = vadd.f32 %v47, %v759
    %v761 = vpop.f32.mrb[0].mxu0
    %762 = vdwg.mxu0
    %v763 = vsel %vm283, %v755, -inf
    %764 = vmax.xlane.f32.xlu0 %v763
    %v765 = vpop.xlane.xlu0 %764
    %v766 = vsel %vm283, %v760, -inf
    %767 = vmax.xlane.f32.xlu0 %v766
    %v768 = vpop.xlane.xlu0 %767
    %v769 = vsub.f32 %v755, %v765
    %v770 = vsub.f32 %v760, %v768
    %v771 = vmul.f32 %v769, 1.442695
    %v772 = vpow.pop %v771
    %v773 = vmul.f32 %v770, 1.442695
    %v774 = vpow.pop %v773
    %v775 = vsel %vm283, %v772, 0.0
    %776 = vadd.xlane.f32.xlu0 %v775
    %v777 = vpop.xlane.xlu0 %776
    %v778 = vsel %vm283, %v774, 0.0
    %779 = vadd.xlane.f32.xlu0 %v778
    %v780 = vpop.xlane.xlu0 %779
    %v781 = vrcp.pop %v777
    %v782 = vmul.f32 %v772, %v781
    %v783 = vrcp.pop %v780
    %v784 = vmul.f32 %v774, %v783
    %785 = vrot.lane.b32.xlu0 %v166, 64
    %v786 = vpop.permute.xlu0 %785
    %787 = vrot.lane.b32.xlu0 %v172, 64
    %v788 = vpop.permute.xlu0 %787
    %v792 = vsel %vm283, %v782, 0
    %v795 = vsel %vm283, %v784, 0
    %797 = vmatprep.subr.mxu0 0.0
    %798 = vmatpush1.msra.mxu0 %v786
    %799 = vmatprep.subr.mxu0 0.0
    %800 = vmatpush1.msra.mxu0 %v788
    %801 = vmatprep.subr.mxu0 0.0
    %802 = vmatpush1.msra.mxu0 0.0
    %803 = vmatprep.subr.mxu0 0.0
    %804 = vmatpush1.msra.mxu0 0.0
    %805 = vmatprep.subr.mxu0 0.0
    %806 = vmatpush1.msra.mxu0 0.0
    %807 = vmatprep.subr.mxu0 0.0
    %808 = vmatpush1.msra.mxu0 0.0
    %809 = vmatprep.subr.mxu0 0.0
    %810 = vmatpush1.msra.mxu0 0.0
    %811 = vmatprep.subr.mxu0 0.0
    %812 = vmatpush1.msra.mxu0 0.0
    %813 = vmatprep.subr.mxu0 0.0
    %814 = vmatpush1.msra.mxu0 0.0
    %815 = vmatprep.subr.mxu0 0.0
    %816 = vmatpush1.msra.mxu0 0.0
    %817 = vmatprep.subr.mxu0 0.0
    %818 = vmatpush1.msra.mxu0 0.0
    %819 = vmatprep.subr.mxu0 0.0
    %820 = vmatpush1.msra.mxu0 0.0
    %821 = vmatprep.subr.mxu0 0.0
    %822 = vmatpush1.msra.mxu0 0.0
    %823 = vmatprep.subr.mxu0 0.0
    %824 = vmatpush1.msra.mxu0 0.0
    %825 = vmatprep.subr.mxu0 0.0
    %826 = vmatpush1.msra.mxu0 0.0
    %827 = vmatprep.subr.mxu0 0.0
    %828 = vmatpush1.msra.mxu0 0.0
    %829 = vmatprep.subr.mxu0 0.0
    %830 = vmatpush1.msra.mxu0 0.0
    %831 = vmatprep.subr.mxu0 0.0
    %832 = vmatpush1.msra.mxu0 0.0
    %833 = vmatprep.subr.mxu0 0.0
    %834 = vmatpush1.msra.mxu0 0.0
    %835 = vmatprep.subr.mxu0 0.0
    %836 = vmatpush1.msra.mxu0 0.0
    %837 = vmatprep.subr.mxu0 0.0
    %838 = vmatpush1.msra.mxu0 0.0
    %839 = vmatprep.subr.mxu0 0.0
    %840 = vmatpush1.msra.mxu0 0.0
    %841 = vmatprep.subr.mxu0 0.0
    %842 = vmatpush1.msra.mxu0 0.0
    %843 = vmatprep.subr.mxu0 0.0
    %844 = vmatpush1.msra.mxu0 0.0
    %845 = vmatprep.subr.mxu0 0.0
    %846 = vmatpush1.msra.mxu0 0.0
    %847 = vmatprep.subr.mxu0 0.0
    %848 = vmatpush1.msra.mxu0 0.0
    %849 = vmatprep.subr.mxu0 0.0
    %850 = vmatpush1.msra.mxu0 0.0
    %851 = vmatprep.subr.mxu0 0.0
    %852 = vmatpush1.msra.mxu0 0.0
    %853 = vmatprep.subr.mxu0 0.0
    %854 = vmatpush1.msra.mxu0 0.0
    %855 = vmatprep.subr.mxu0 0.0
    %856 = vmatpush1.msra.mxu0 0.0
    %857 = vmatprep.subr.mxu0 0.0
    %858 = vmatpush1.msra.mxu0 0.0
    %859 = vmatprep.subr.mxu0 0.0
    %860 = vmatpush1.msra.mxu0 0.0
    %861 = vmatprep.mubr.f32.mxu0 0.0
    %862 = vmatmul.mubr.f32.gmra.mrb[0].mxu0 %v792
    %v863 = vpop.f32.mrb[0].mxu0
    %v864 = vadd.f32 0.0, %v863
    %v865 = vpop.f32.mrb[0].mxu0
    %866 = vmatprep.mubr.f32.mxu0 0.0
    %867 = vmatmul.mubr.f32.gmra.mrb[0].mxu0 %v795
    %v868 = vpop.f32.mrb[0].mxu0
    %v869 = vadd.f32 0.0, %v868
    %v870 = vpop.f32.mrb[0].mxu0
    %871 = vdwg.mxu0
    %v872 = vadd.f32 %v664, %v864
    %v873 = vadd.f32 %v669, %v869
    %874 = vrot.lane.b32.xlu0 %v164, 80
    %v875 = vpop.permute.xlu0 %874
    %876 = vrot.lane.b32.xlu0 %v170, 80
    %v877 = vpop.permute.xlu0 %876
    %878 = vrot.lane.b32.xlu0 %v164, 16
    %v879 = vpop.permute.xlu0 %878
    %880 = vrot.lane.b32.xlu0 %v170, 16
    %v881 = vpop.permute.xlu0 %880
    %v882 = vsel %vm283, %v875, 0
    %v884 = vsel %vm283, %v877, 0
    %v886 = vsel %vm283, %v879, 0
    %v888 = vsel %vm283, %v881, 0
    %890 = vmatprep.subr.mxu0 0.0
    %891 = vmatpush1.xpose.msra.mxu0 %v886
    %892 = vmatprep.subr.mxu0 0.0
    %893 = vmatpush1.xpose.msra.mxu0 %v888
    %894 = vmatprep.subr.mxu0 0.0
    %895 = vmatpush1.xpose.msra.mxu0 0.0
    %896 = vmatprep.subr.mxu0 0.0
    %897 = vmatpush1.xpose.msra.mxu0 0.0
    %898 = vmatprep.subr.mxu0 0.0
    %899 = vmatpush1.xpose.msra.mxu0 0.0
    %900 = vmatprep.subr.mxu0 0.0
    %901 = vmatpush1.xpose.msra.mxu0 0.0
    %902 = vmatprep.subr.mxu0 0.0
    %903 = vmatpush1.xpose.msra.mxu0 0.0
    %904 = vmatprep.subr.mxu0 0.0
    %905 = vmatpush1.xpose.msra.mxu0 0.0
    %906 = vmatprep.subr.mxu0 0.0
    %907 = vmatpush1.xpose.msra.mxu0 0.0
    %908 = vmatprep.subr.mxu0 0.0
    %909 = vmatpush1.xpose.msra.mxu0 0.0
    %910 = vmatprep.subr.mxu0 0.0
    %911 = vmatpush1.xpose.msra.mxu0 0.0
    %912 = vmatprep.subr.mxu0 0.0
    %913 = vmatpush1.xpose.msra.mxu0 0.0
    %914 = vmatprep.subr.mxu0 0.0
    %915 = vmatpush1.xpose.msra.mxu0 0.0
    %916 = vmatprep.subr.mxu0 0.0
    %917 = vmatpush1.xpose.msra.mxu0 0.0
    %918 = vmatprep.subr.mxu0 0.0
    %919 = vmatpush1.xpose.msra.mxu0 0.0
    %920 = vmatprep.subr.mxu0 0.0
    %921 = vmatpush1.xpose.msra.mxu0 0.0
    %922 = vmatprep.subr.mxu0 0.0
    %923 = vmatpush1.xpose.msra.mxu0 0.0
    %924 = vmatprep.subr.mxu0 0.0
    %925 = vmatpush1.xpose.msra.mxu0 0.0
    %926 = vmatprep.subr.mxu0 0.0
    %927 = vmatpush1.xpose.msra.mxu0 0.0
    %928 = vmatprep.subr.mxu0 0.0
    %929 = vmatpush1.xpose.msra.mxu0 0.0
    %930 = vmatprep.subr.mxu0 0.0
    %931 = vmatpush1.xpose.msra.mxu0 0.0
    %932 = vmatprep.subr.mxu0 0.0
    %933 = vmatpush1.xpose.msra.mxu0 0.0
    %934 = vmatprep.subr.mxu0 0.0
    %935 = vmatpush1.xpose.msra.mxu0 0.0
    %936 = vmatprep.subr.mxu0 0.0
    %937 = vmatpush1.xpose.msra.mxu0 0.0
    %938 = vmatprep.subr.mxu0 0.0
    %939 = vmatpush1.xpose.msra.mxu0 0.0
    %940 = vmatprep.subr.mxu0 0.0
    %941 = vmatpush1.xpose.msra.mxu0 0.0
    %942 = vmatprep.subr.mxu0 0.0
    %943 = vmatpush1.xpose.msra.mxu0 0.0
    %944 = vmatprep.subr.mxu0 0.0
    %945 = vmatpush1.xpose.msra.mxu0 0.0
    %946 = vmatprep.subr.mxu0 0.0
    %947 = vmatpush1.xpose.msra.mxu0 0.0
    %948 = vmatprep.subr.mxu0 0.0
    %949 = vmatpush1.xpose.msra.mxu0 0.0
    %950 = vmatprep.subr.mxu0 0.0
    %951 = vmatpush1.xpose.msra.mxu0 0.0
    %952 = vmatprep.subr.mxu0 0.0
    %953 = vmatpush1.xpose.msra.mxu0 0.0
    %954 = vmatprep.mubr.f32.mxu0 0.0
    %955 = vmatmul.mubr.f32.gmra.mrb[0].mxu0 %v882
    %v956 = vpop.f32.mrb[0].mxu0
    %v957 = vadd.f32 %v45, %v956
    %v958 = vpop.f32.mrb[0].mxu0
    %959 = vmatprep.mubr.f32.mxu0 0.0
    %960 = vmatmul.mubr.f32.gmra.mrb[0].mxu0 %v884
    %v961 = vpop.f32.mrb[0].mxu0
    %v962 = vadd.f32 %v47, %v961
    %v963 = vpop.f32.mrb[0].mxu0
    %964 = vdwg.mxu0
    %v965 = vsel %vm283, %v957, -inf
    %966 = vmax.xlane.f32.xlu0 %v965
    %v967 = vpop.xlane.xlu0 %966
    %v968 = vsel %vm283, %v962, -inf
    %969 = vmax.xlane.f32.xlu0 %v968
    %v970 = vpop.xlane.xlu0 %969
    %v971 = vsub.f32 %v957, %v967
    %v972 = vsub.f32 %v962, %v970
    %v973 = vmul.f32 %v971, 1.442695
    %v974 = vpow.pop %v973
    %v975 = vmul.f32 %v972, 1.442695
    %v976 = vpow.pop %v975
    %v977 = vsel %vm283, %v974, 0.0
    %978 = vadd.xlane.f32.xlu0 %v977
    %v979 = vpop.xlane.xlu0 %978
    %v980 = vsel %vm283, %v976, 0.0
    %981 = vadd.xlane.f32.xlu0 %v980
    %v982 = vpop.xlane.xlu0 %981
    %v983 = vrcp.pop %v979
    %v984 = vmul.f32 %v974, %v983
    %v985 = vrcp.pop %v982
    %v986 = vmul.f32 %v976, %v985
    %987 = vrot.lane.b32.xlu0 %v166, 32
    %v988 = vpop.permute.xlu0 %987
    %989 = vrot.lane.b32.xlu0 %v172, 32
    %v990 = vpop.permute.xlu0 %989
    %v994 = vsel %vm283, %v984, 0
    %v997 = vsel %vm283, %v986, 0
    %999 = vmatprep.subr.mxu0 0.0
    %1000 = vmatpush1.msra.mxu0 %v988
    %1001 = vmatprep.subr.mxu0 0.0
    %1002 = vmatpush1.msra.mxu0 %v990
    %1003 = vmatprep.subr.mxu0 0.0
    %1004 = vmatpush1.msra.mxu0 0.0
    %1005 = vmatprep.subr.mxu0 0.0
    %1006 = vmatpush1.msra.mxu0 0.0
    %1007 = vmatprep.subr.mxu0 0.0
    %1008 = vmatpush1.msra.mxu0 0.0
    %1009 = vmatprep.subr.mxu0 0.0
    %1010 = vmatpush1.msra.mxu0 0.0
    %1011 = vmatprep.subr.mxu0 0.0
    %1012 = vmatpush1.msra.mxu0 0.0
    %1013 = vmatprep.subr.mxu0 0.0
    %1014 = vmatpush1.msra.mxu0 0.0
    %1015 = vmatprep.subr.mxu0 0.0
    %1016 = vmatpush1.msra.mxu0 0.0
    %1017 = vmatprep.subr.mxu0 0.0
    %1018 = vmatpush1.msra.mxu0 0.0
    %1019 = vmatprep.subr.mxu0 0.0
    %1020 = vmatpush1.msra.mxu0 0.0
    %1021 = vmatprep.subr.mxu0 0.0
    %1022 = vmatpush1.msra.mxu0 0.0
    %1023 = vmatprep.subr.mxu0 0.0
    %1024 = vmatpush1.msra.mxu0 0.0
    %1025 = vmatprep.subr.mxu0 0.0
    %1026 = vmatpush1.msra.mxu0 0.0
    %1027 = vmatprep.subr.mxu0 0.0
    %1028 = vmatpush1.msra.mxu0 0.0
    %1029 = vmatprep.subr.mxu0 0.0
    %1030 = vmatpush1.msra.mxu0 0.0
    %1031 = vmatprep.subr.mxu0 0.0
    %1032 = vmatpush1.msra.mxu0 0.0
    %1033 = vmatprep.subr.mxu0 0.0
    %1034 = vmatpush1.msra.mxu0 0.0
    %1035 = vmatprep.subr.mxu0 0.0
    %1036 = vmatpush1.msra.mxu0 0.0
    %1037 = vmatprep.subr.mxu0 0.0
    %1038 = vmatpush1.msra.mxu0 0.0
    %1039 = vmatprep.subr.mxu0 0.0
    %1040 = vmatpush1.msra.mxu0 0.0
    %1041 = vmatprep.subr.mxu0 0.0
    %1042 = vmatpush1.msra.mxu0 0.0
    %1043 = vmatprep.subr.mxu0 0.0
    %1044 = vmatpush1.msra.mxu0 0.0
    %1045 = vmatprep.subr.mxu0 0.0
    %1046 = vmatpush1.msra.mxu0 0.0
    %1047 = vmatprep.subr.mxu0 0.0
    %1048 = vmatpush1.msra.mxu0 0.0
    %1049 = vmatprep.subr.mxu0 0.0
    %1050 = vmatpush1.msra.mxu0 0.0
    %1051 = vmatprep.subr.mxu0 0.0
    %1052 = vmatpush1.msra.mxu0 0.0
    %1053 = vmatprep.subr.mxu0 0.0
    %1054 = vmatpush1.msra.mxu0 0.0
    %1055 = vmatprep.subr.mxu0 0.0
    %1056 = vmatpush1.msra.mxu0 0.0
    %1057 = vmatprep.subr.mxu0 0.0
    %1058 = vmatpush1.msra.mxu0 0.0
    %1059 = vmatprep.subr.mxu0 0.0
    %1060 = vmatpush1.msra.mxu0 0.0
    %1061 = vmatprep.subr.mxu0 0.0
    %1062 = vmatpush1.msra.mxu0 0.0
    %1063 = vmatprep.mubr.f32.mxu0 0.0
    %1064 = vmatmul.mubr.f32.gmra.mrb[0].mxu0 %v994
    %v1065 = vpop.f32.mrb[0].mxu0
    %v1066 = vadd.f32 0.0, %v1065
    %v1067 = vpop.f32.mrb[0].mxu0
    %1068 = vmatprep.mubr.f32.mxu0 0.0
    %1069 = vmatmul.mubr.f32.gmra.mrb[0].mxu0 %v997
    %v1070 = vpop.f32.mrb[0].mxu0
    %v1071 = vadd.f32 0.0, %v1070
    %v1072 = vpop.f32.mrb[0].mxu0
    %1073 = vdwg.mxu0
    %v1074 = vadd.f32 %v872, %v1066
    %v1075 = vadd.f32 %v873, %v1071
    %v1076 = vlaneseq
    %v1077 = vshrl.u32 %v1076, 7
    %v1078 = vsub.s32 2, %v1077
    %v1079 = vrot.slane %v40, %v1078
    %v1080 = vadd.f32 %v1074, %v1079
    %v1081 = vadd.f32 %v1075, %v1079
    %v1082 = vadd.f32 %v1080, %v35
    %v1083 = vadd.f32 %v1081, %v36
    %v1084 = vsel %vm81, %v1082, 0.0
    %1085 = vadd.xlane.f32.xlu0 %v1084
    %v1086 = vpop.xlane.xlu0 %1085
    %v1087 = vsel %vm81, %v1083, 0.0
    %1088 = vadd.xlane.f32.xlu0 %v1087
    %v1089 = vpop.xlane.xlu0 %1088
    %v1090 = vrcp.pop 32.0
    %v1091 = vmul.f32 %v1086, %v1090
    %v1092 = vmul.f32 %v1089, %v1090
    %v1093 = vsub.f32 %v1082, %v1091
    %v1094 = vsub.f32 %v1083, %v1092
    %v1095 = vmul.f32 %v1093, %v1093
    %v1096 = vmul.f32 %v1094, %v1094
    %v1097 = vsel %vm81, %v1095, 0.0
    %1098 = vadd.xlane.f32.xlu0 %v1097
    %v1099 = vpop.xlane.xlu0 %1098
    %v1100 = vsel %vm81, %v1096, 0.0
    %1101 = vadd.xlane.f32.xlu0 %v1100
    %v1102 = vpop.xlane.xlu0 %1101
    %v1103 = vmul.f32 %v1099, %v1090
    %v1104 = vmul.f32 %v1102, %v1090
    %v1105 = vadd.f32 %v1103, 1e-05
    %v1106 = vadd.f32 %v1104, 1e-05
    %v1107 = vrsqrt.pop %v1105
    %v1108 = vrsqrt.pop %v1106
    %v1109 = vmul.f32 %v1093, %v1107
    %v1110 = vmul.f32 %v1094, %v1108
    %v1111 = vlaneseq
    %v1112 = vshrl.u32 %v1111, 7
    %v1113 = vsub.s32 5, %v1112
    %v1114 = vrot.slane %v40, %v1113
    %v1115 = vmul.f32 %v1109, %v1114
    %v1116 = vmul.f32 %v1110, %v1114
    %v1117 = vlaneseq
    %v1118 = vshrl.u32 %v1117, 7
    %v1119 = vsub.s32 6, %v1118
    %v1120 = vrot.slane %v40, %v1119
    %v1121 = vadd.f32 %v1115, %v1120
    %v1122 = vadd.f32 %v1116, %v1120
    %v1123 = vld [vmem:[%s2] sm:$0xff]
    %v1124 = vld [vmem:[%s2 + $0x8] sm:$0xff]
    %v1125 = vld [vmem:[%s2 + $0x10] sm:$0xff]
    %v1126 = vld [vmem:[%s2 + $0x18] sm:$0xff]
    %v1127 = vlaneseq
    %v1128 = vshrl.u32 %v1127, 7
    %v1129 = vsub.s32 1, %v1128
    %v1130 = vrot.slane %v40, %v1129
    %v1132 = vsel %vm81, %v1121, 0
    %v1135 = vsel %vm81, %v1122, 0
    %1137 = vmatprep.subr.mxu0 0.0
    %1138 = vmatpush1.msra.mxu0 %v1123
    %1139 = vmatprep.subr.mxu0 0.0
    %1140 = vmatpush1.msra.mxu0 %v1124
    %1141 = vmatprep.subr.mxu0 0.0
    %1142 = vmatpush1.msra.mxu0 %v1125
    %1143 = vmatprep.subr.mxu0 0.0
    %1144 = vmatpush1.msra.mxu0 %v1126
    %1145 = vmatprep.subr.mxu0 0.0
    %1146 = vmatpush1.msra.mxu0 0.0
    %1147 = vmatprep.subr.mxu0 0.0
    %1148 = vmatpush1.msra.mxu0 0.0
    %1149 = vmatprep.subr.mxu0 0.0
    %1150 = vmatpush1.msra.mxu0 0.0
    %1151 = vmatprep.subr.mxu0 0.0
    %1152 = vmatpush1.msra.mxu0 0.0
    %1153 = vmatprep.subr.mxu0 0.0
    %1154 = vmatpush1.msra.mxu0 0.0
    %1155 = vmatprep.subr.mxu0 0.0
    %1156 = vmatpush1.msra.mxu0 0.0
    %1157 = vmatprep.subr.mxu0 0.0
    %1158 = vmatpush1.msra.mxu0 0.0
    %1159 = vmatprep.subr.mxu0 0.0
    %1160 = vmatpush1.msra.mxu0 0.0
    %1161 = vmatprep.subr.mxu0 0.0
    %1162 = vmatpush1.msra.mxu0 0.0
    %1163 = vmatprep.subr.mxu0 0.0
    %1164 = vmatpush1.msra.mxu0 0.0
    %1165 = vmatprep.subr.mxu0 0.0
    %1166 = vmatpush1.msra.mxu0 0.0
    %1167 = vmatprep.subr.mxu0 0.0
    %1168 = vmatpush1.msra.mxu0 0.0
    %1169 = vmatprep.subr.mxu0 0.0
    %1170 = vmatpush1.msra.mxu0 0.0
    %1171 = vmatprep.subr.mxu0 0.0
    %1172 = vmatpush1.msra.mxu0 0.0
    %1173 = vmatprep.subr.mxu0 0.0
    %1174 = vmatpush1.msra.mxu0 0.0
    %1175 = vmatprep.subr.mxu0 0.0
    %1176 = vmatpush1.msra.mxu0 0.0
    %1177 = vmatprep.subr.mxu0 0.0
    %1178 = vmatpush1.msra.mxu0 0.0
    %1179 = vmatprep.subr.mxu0 0.0
    %1180 = vmatpush1.msra.mxu0 0.0
    %1181 = vmatprep.subr.mxu0 0.0
    %1182 = vmatpush1.msra.mxu0 0.0
    %1183 = vmatprep.subr.mxu0 0.0
    %1184 = vmatpush1.msra.mxu0 0.0
    %1185 = vmatprep.subr.mxu0 0.0
    %1186 = vmatpush1.msra.mxu0 0.0
    %1187 = vmatprep.subr.mxu0 0.0
    %1188 = vmatpush1.msra.mxu0 0.0
    %1189 = vmatprep.subr.mxu0 0.0
    %1190 = vmatpush1.msra.mxu0 0.0
    %1191 = vmatprep.subr.mxu0 0.0
    %1192 = vmatpush1.msra.mxu0 0.0
    %1193 = vmatprep.subr.mxu0 0.0
    %1194 = vmatpush1.msra.mxu0 0.0
    %1195 = vmatprep.subr.mxu0 0.0
    %1196 = vmatpush1.msra.mxu0 0.0
    %1197 = vmatprep.subr.mxu0 0.0
    %1198 = vmatpush1.msra.mxu0 0.0
    %1199 = vmatprep.subr.mxu0 0.0
    %1200 = vmatpush1.msra.mxu0 0.0
    %1201 = vmatprep.mubr.f32.mxu0 0.0
    %1202 = vmatmul.mubr.f32.gmra.mrb[0].mxu0 %v1132
    %v1203 = vpop.f32.mrb[0].mxu0
    %v1204 = vadd.f32 %v1130, %v1203
    %v1205 = vpop.f32.mrb[0].mxu0
    %1206 = vmatprep.mubr.f32.mxu0 0.0
    %1207 = vmatmul.mubr.f32.gmra.mrb[0].mxu0 %v1135
    %v1208 = vpop.f32.mrb[0].mxu0
    %v1209 = vadd.f32 %v1130, %v1208
    %v1210 = vpop.f32.mrb[0].mxu0
    %1211 = vdwg.mxu0
    %v1213 = vsel %vm283, %v1204, 0
    %v1216 = vsel %vm283, %v1209, 0
    %v1219 = vsel %vm283, %v261, 0
    %v1222 = vsel %vm283, %v267, 0
    %v1225 = vsel %vm283, %v273, 0
    %1227 = vmatprep.subr.mxu0 0.0
    %1228 = vmatpush1.xpose.msra.mxu0 %v1219
    %1229 = vmatprep.subr.mxu0 0.0
    %1230 = vmatpush1.xpose.msra.mxu0 %v1222
    %1231 = vmatprep.subr.mxu0 0.0
    %1232 = vmatpush1.xpose.msra.mxu0 %v1225
    %1233 = vmatprep.subr.mxu0 0.0
    %1234 = vmatpush1.xpose.msra.mxu0 0.0
    %1235 = vmatprep.subr.mxu0 0.0
    %1236 = vmatpush1.xpose.msra.mxu0 0.0
    %1237 = vmatprep.subr.mxu0 0.0
    %1238 = vmatpush1.xpose.msra.mxu0 0.0
    %1239 = vmatprep.subr.mxu0 0.0
    %1240 = vmatpush1.xpose.msra.mxu0 0.0
    %1241 = vmatprep.subr.mxu0 0.0
    %1242 = vmatpush1.xpose.msra.mxu0 0.0
    %1243 = vmatprep.subr.mxu0 0.0
    %1244 = vmatpush1.xpose.msra.mxu0 0.0
    %1245 = vmatprep.subr.mxu0 0.0
    %1246 = vmatpush1.xpose.msra.mxu0 0.0
    %1247 = vmatprep.subr.mxu0 0.0
    %1248 = vmatpush1.xpose.msra.mxu0 0.0
    %1249 = vmatprep.subr.mxu0 0.0
    %1250 = vmatpush1.xpose.msra.mxu0 0.0
    %1251 = vmatprep.subr.mxu0 0.0
    %1252 = vmatpush1.xpose.msra.mxu0 0.0
    %1253 = vmatprep.subr.mxu0 0.0
    %1254 = vmatpush1.xpose.msra.mxu0 0.0
    %1255 = vmatprep.subr.mxu0 0.0
    %1256 = vmatpush1.xpose.msra.mxu0 0.0
    %1257 = vmatprep.subr.mxu0 0.0
    %1258 = vmatpush1.xpose.msra.mxu0 0.0
    %1259 = vmatprep.subr.mxu0 0.0
    %1260 = vmatpush1.xpose.msra.mxu0 0.0
    %1261 = vmatprep.subr.mxu0 0.0
    %1262 = vmatpush1.xpose.msra.mxu0 0.0
    %1263 = vmatprep.subr.mxu0 0.0
    %1264 = vmatpush1.xpose.msra.mxu0 0.0
    %1265 = vmatprep.subr.mxu0 0.0
    %1266 = vmatpush1.xpose.msra.mxu0 0.0
    %1267 = vmatprep.subr.mxu0 0.0
    %1268 = vmatpush1.xpose.msra.mxu0 0.0
    %1269 = vmatprep.subr.mxu0 0.0
    %1270 = vmatpush1.xpose.msra.mxu0 0.0
    %1271 = vmatprep.subr.mxu0 0.0
    %1272 = vmatpush1.xpose.msra.mxu0 0.0
    %1273 = vmatprep.subr.mxu0 0.0
    %1274 = vmatpush1.xpose.msra.mxu0 0.0
    %1275 = vmatprep.subr.mxu0 0.0
    %1276 = vmatpush1.xpose.msra.mxu0 0.0
    %1277 = vmatprep.subr.mxu0 0.0
    %1278 = vmatpush1.xpose.msra.mxu0 0.0
    %1279 = vmatprep.subr.mxu0 0.0
    %1280 = vmatpush1.xpose.msra.mxu0 0.0
    %1281 = vmatprep.subr.mxu0 0.0
    %1282 = vmatpush1.xpose.msra.mxu0 0.0
    %1283 = vmatprep.subr.mxu0 0.0
    %1284 = vmatpush1.xpose.msra.mxu0 0.0
    %1285 = vmatprep.subr.mxu0 0.0
    %1286 = vmatpush1.xpose.msra.mxu0 0.0
    %1287 = vmatprep.subr.mxu0 0.0
    %1288 = vmatpush1.xpose.msra.mxu0 0.0
    %1289 = vmatprep.subr.mxu0 0.0
    %1290 = vmatpush1.xpose.msra.mxu0 0.0
    %1291 = vmatprep.mubr.f32.mxu0 0.0
    %1292 = vmatmul.mubr.f32.gmra.mrb[0].mxu0 %v1213
    %v1293 = vpop.f32.mrb[0].mxu0
    %v1294 = vadd.f32 %v46, %v1293
    %v1295 = vpop.f32.mrb[0].mxu0
    %1296 = vmatprep.mubr.f32.mxu0 0.0
    %1297 = vmatmul.mubr.f32.gmra.mrb[0].mxu0 %v1216
    %v1298 = vpop.f32.mrb[0].mxu0
    %v1299 = vadd.f32 %v48, %v1298
    %v1300 = vpop.f32.mrb[0].mxu0
    %1301 = vdwg.mxu0
    %vm1302 = vcmask 162816
    %v1303 = vsel %vm1302, %v1294, -inf
    %1304 = vmax.xlane.f32.xlu0 %v1303
    %v1305 = vpop.xlane.xlu0 %1304
    %v1306 = vsel %vm1302, %v1299, -inf
    %1307 = vmax.xlane.f32.xlu0 %v1306
    %v1308 = vpop.xlane.xlu0 %1307
    %v1309 = vsub.f32 %v1294, %v1305
    %v1310 = vsub.f32 %v1299, %v1308
    %v1311 = vmul.f32 %v1309, 1.442695
    %v1312 = vpow.pop %v1311
    %v1313 = vmul.f32 %v1310, 1.442695
    %v1314 = vpow.pop %v1313
    %v1315 = vsel %vm1302, %v1312, 0.0
    %1316 = vadd.xlane.f32.xlu0 %v1315
    %v1317 = vpop.xlane.xlu0 %1316
    %v1318 = vsel %vm1302, %v1314, 0.0
    %1319 = vadd.xlane.f32.xlu0 %v1318
    %v1320 = vpop.xlane.xlu0 %1319
    %v1321 = vrcp.pop %v1317
    %v1322 = vmul.f32 %v1312, %v1321
    %v1323 = vrcp.pop %v1320
    %v1324 = vmul.f32 %v1314, %v1323
    %1325 = vrot.lane.b32.xlu0 %v1204, 112
    %v1326 = vpop.permute.xlu0 %1325
    %1327 = vrot.lane.b32.xlu0 %v1209, 112
    %v1328 = vpop.permute.xlu0 %1327
    %1329 = vrot.lane.b32.xlu0 %v261, 112
    %v1330 = vpop.permute.xlu0 %1329
    %1331 = vrot.lane.b32.xlu0 %v267, 112
    %v1332 = vpop.permute.xlu0 %1331
    %1333 = vrot.lane.b32.xlu0 %v273, 112
    %v1334 = vpop.permute.xlu0 %1333
    %v1335 = vsel %vm283, %v1326, 0
    %v1337 = vsel %vm283, %v1328, 0
    %v1339 = vsel %vm283, %v1330, 0
    %v1341 = vsel %vm283, %v1332, 0
    %v1343 = vsel %vm283, %v1334, 0
    %1345 = vmatprep.subr.mxu0 0.0
    %1346 = vmatpush1.xpose.msra.mxu0 %v1339
    %1347 = vmatprep.subr.mxu0 0.0
    %1348 = vmatpush1.xpose.msra.mxu0 %v1341
    %1349 = vmatprep.subr.mxu0 0.0
    %1350 = vmatpush1.xpose.msra.mxu0 %v1343
    %1351 = vmatprep.subr.mxu0 0.0
    %1352 = vmatpush1.xpose.msra.mxu0 0.0
    %1353 = vmatprep.subr.mxu0 0.0
    %1354 = vmatpush1.xpose.msra.mxu0 0.0
    %1355 = vmatprep.subr.mxu0 0.0
    %1356 = vmatpush1.xpose.msra.mxu0 0.0
    %1357 = vmatprep.subr.mxu0 0.0
    %1358 = vmatpush1.xpose.msra.mxu0 0.0
    %1359 = vmatprep.subr.mxu0 0.0
    %1360 = vmatpush1.xpose.msra.mxu0 0.0
    %1361 = vmatprep.subr.mxu0 0.0
    %1362 = vmatpush1.xpose.msra.mxu0 0.0
    %1363 = vmatprep.subr.mxu0 0.0
    %1364 = vmatpush1.xpose.msra.mxu0 0.0
    %1365 = vmatprep.subr.mxu0 0.0
    %1366 = vmatpush1.xpose.msra.mxu0 0.0
    %1367 = vmatprep.subr.mxu0 0.0
    %1368 = vmatpush1.xpose.msra.mxu0 0.0
    %1369 = vmatprep.subr.mxu0 0.0
    %1370 = vmatpush1.xpose.msra.mxu0 0.0
    %1371 = vmatprep.subr.mxu0 0.0
    %1372 = vmatpush1.xpose.msra.mxu0 0.0
    %1373 = vmatprep.subr.mxu0 0.0
    %1374 = vmatpush1.xpose.msra.mxu0 0.0
    %1375 = vmatprep.subr.mxu0 0.0
    %1376 = vmatpush1.xpose.msra.mxu0 0.0
    %1377 = vmatprep.subr.mxu0 0.0
    %1378 = vmatpush1.xpose.msra.mxu0 0.0
    %1379 = vmatprep.subr.mxu0 0.0
    %1380 = vmatpush1.xpose.msra.mxu0 0.0
    %1381 = vmatprep.subr.mxu0 0.0
    %1382 = vmatpush1.xpose.msra.mxu0 0.0
    %1383 = vmatprep.subr.mxu0 0.0
    %1384 = vmatpush1.xpose.msra.mxu0 0.0
    %1385 = vmatprep.subr.mxu0 0.0
    %1386 = vmatpush1.xpose.msra.mxu0 0.0
    %1387 = vmatprep.subr.mxu0 0.0
    %1388 = vmatpush1.xpose.msra.mxu0 0.0
    %1389 = vmatprep.subr.mxu0 0.0
    %1390 = vmatpush1.xpose.msra.mxu0 0.0
    %1391 = vmatprep.subr.mxu0 0.0
    %1392 = vmatpush1.xpose.msra.mxu0 0.0
    %1393 = vmatprep.subr.mxu0 0.0
    %1394 = vmatpush1.xpose.msra.mxu0 0.0
    %1395 = vmatprep.subr.mxu0 0.0
    %1396 = vmatpush1.xpose.msra.mxu0 0.0
    %1397 = vmatprep.subr.mxu0 0.0
    %1398 = vmatpush1.xpose.msra.mxu0 0.0
    %1399 = vmatprep.subr.mxu0 0.0
    %1400 = vmatpush1.xpose.msra.mxu0 0.0
    %1401 = vmatprep.subr.mxu0 0.0
    %1402 = vmatpush1.xpose.msra.mxu0 0.0
    %1403 = vmatprep.subr.mxu0 0.0
    %1404 = vmatpush1.xpose.msra.mxu0 0.0
    %1405 = vmatprep.subr.mxu0 0.0
    %1406 = vmatpush1.xpose.msra.mxu0 0.0
    %1407 = vmatprep.subr.mxu0 0.0
    %1408 = vmatpush1.xpose.msra.mxu0 0.0
    %1409 = vmatprep.mubr.f32.mxu0 0.0
    %1410 = vmatmul.mubr.f32.gmra.mrb[0].mxu0 %v1335
    %v1411 = vpop.f32.mrb[0].mxu0
    %v1412 = vadd.f32 %v46, %v1411
    %v1413 = vpop.f32.mrb[0].mxu0
    %1414 = vmatprep.mubr.f32.mxu0 0.0
    %1415 = vmatmul.mubr.f32.gmra.mrb[0].mxu0 %v1337
    %v1416 = vpop.f32.mrb[0].mxu0
    %v1417 = vadd.f32 %v48, %v1416
    %v1418 = vpop.f32.mrb[0].mxu0
    %1419 = vdwg.mxu0
    %v1420 = vsel %vm1302, %v1412, -inf
    %1421 = vmax.xlane.f32.xlu0 %v1420
    %v1422 = vpop.xlane.xlu0 %1421
    %v1423 = vsel %vm1302, %v1417, -inf
    %1424 = vmax.xlane.f32.xlu0 %v1423
    %v1425 = vpop.xlane.xlu0 %1424
    %v1426 = vsub.f32 %v1412, %v1422
    %v1427 = vsub.f32 %v1417, %v1425
    %v1428 = vmul.f32 %v1426, 1.442695
    %v1429 = vpow.pop %v1428
    %v1430 = vmul.f32 %v1427, 1.442695
    %v1431 = vpow.pop %v1430
    %v1432 = vsel %vm1302, %v1429, 0.0
    %1433 = vadd.xlane.f32.xlu0 %v1432
    %v1434 = vpop.xlane.xlu0 %1433
    %v1435 = vsel %vm1302, %v1431, 0.0
    %1436 = vadd.xlane.f32.xlu0 %v1435
    %v1437 = vpop.xlane.xlu0 %1436
    %v1438 = vrcp.pop %v1434
    %v1439 = vmul.f32 %v1429, %v1438
    %v1440 = vrcp.pop %v1437
    %v1441 = vmul.f32 %v1431, %v1440
    %1442 = vrot.lane.b32.xlu0 %v261, 32
    %v1443 = vpop.permute.xlu0 %1442
    %1444 = vrot.lane.b32.xlu0 %v267, 32
    %v1445 = vpop.permute.xlu0 %1444
    %1446 = vrot.lane.b32.xlu0 %v273, 32
    %v1447 = vpop.permute.xlu0 %1446
    %v1451 = vsel %vm1302, %v1439, 0
    %v1454 = vsel %vm1302, %v1441, 0
    %vm1456 = vcmask 1043456
    %v1457 = vsel %vm1456, %v1447, 0
    %1459 = vmatprep.subr.mxu0 0.0
    %1460 = vmatpush1.msra.mxu0 %v1443
    %1461 = vmatprep.subr.mxu0 0.0
    %1462 = vmatpush1.msra.mxu0 %v1445
    %1463 = vmatprep.subr.mxu0 0.0
    %1464 = vmatpush1.msra.mxu0 %v1457
    %1465 = vmatprep.subr.mxu0 0.0
    %1466 = vmatpush1.msra.mxu0 0.0
    %1467 = vmatprep.subr.mxu0 0.0
    %1468 = vmatpush1.msra.mxu0 0.0
    %1469 = vmatprep.subr.mxu0 0.0
    %1470 = vmatpush1.msra.mxu0 0.0
    %1471 = vmatprep.subr.mxu0 0.0
    %1472 = vmatpush1.msra.mxu0 0.0
    %1473 = vmatprep.subr.mxu0 0.0
    %1474 = vmatpush1.msra.mxu0 0.0
    %1475 = vmatprep.subr.mxu0 0.0
    %1476 = vmatpush1.msra.mxu0 0.0
    %1477 = vmatprep.subr.mxu0 0.0
    %1478 = vmatpush1.msra.mxu0 0.0
    %1479 = vmatprep.subr.mxu0 0.0
    %1480 = vmatpush1.msra.mxu0 0.0
    %1481 = vmatprep.subr.mxu0 0.0
    %1482 = vmatpush1.msra.mxu0 0.0
    %1483 = vmatprep.subr.mxu0 0.0
    %1484 = vmatpush1.msra.mxu0 0.0
    %1485 = vmatprep.subr.mxu0 0.0
    %1486 = vmatpush1.msra.mxu0 0.0
    %1487 = vmatprep.subr.mxu0 0.0
    %1488 = vmatpush1.msra.mxu0 0.0
    %1489 = vmatprep.subr.mxu0 0.0
    %1490 = vmatpush1.msra.mxu0 0.0
    %1491 = vmatprep.subr.mxu0 0.0
    %1492 = vmatpush1.msra.mxu0 0.0
    %1493 = vmatprep.subr.mxu0 0.0
    %1494 = vmatpush1.msra.mxu0 0.0
    %1495 = vmatprep.subr.mxu0 0.0
    %1496 = vmatpush1.msra.mxu0 0.0
    %1497 = vmatprep.subr.mxu0 0.0
    %1498 = vmatpush1.msra.mxu0 0.0
    %1499 = vmatprep.subr.mxu0 0.0
    %1500 = vmatpush1.msra.mxu0 0.0
    %1501 = vmatprep.subr.mxu0 0.0
    %1502 = vmatpush1.msra.mxu0 0.0
    %1503 = vmatprep.subr.mxu0 0.0
    %1504 = vmatpush1.msra.mxu0 0.0
    %1505 = vmatprep.subr.mxu0 0.0
    %1506 = vmatpush1.msra.mxu0 0.0
    %1507 = vmatprep.subr.mxu0 0.0
    %1508 = vmatpush1.msra.mxu0 0.0
    %1509 = vmatprep.subr.mxu0 0.0
    %1510 = vmatpush1.msra.mxu0 0.0
    %1511 = vmatprep.subr.mxu0 0.0
    %1512 = vmatpush1.msra.mxu0 0.0
    %1513 = vmatprep.subr.mxu0 0.0
    %1514 = vmatpush1.msra.mxu0 0.0
    %1515 = vmatprep.subr.mxu0 0.0
    %1516 = vmatpush1.msra.mxu0 0.0
    %1517 = vmatprep.subr.mxu0 0.0
    %1518 = vmatpush1.msra.mxu0 0.0
    %1519 = vmatprep.subr.mxu0 0.0
    %1520 = vmatpush1.msra.mxu0 0.0
    %1521 = vmatprep.subr.mxu0 0.0
    %1522 = vmatpush1.msra.mxu0 0.0
    %1523 = vmatprep.mubr.f32.mxu0 0.0
    %1524 = vmatmul.mubr.f32.gmra.mrb[0].mxu0 %v1451
    %v1525 = vpop.f32.mrb[0].mxu0
    %v1526 = vadd.f32 0.0, %v1525
    %v1527 = vpop.f32.mrb[0].mxu0
    %1528 = vmatprep.mubr.f32.mxu0 0.0
    %1529 = vmatmul.mubr.f32.gmra.mrb[0].mxu0 %v1454
    %v1530 = vpop.f32.mrb[0].mxu0
    %v1531 = vadd.f32 0.0, %v1530
    %v1532 = vpop.f32.mrb[0].mxu0
    %1533 = vdwg.mxu0
    %1534 = vrot.lane.b32.xlu0 %v261, 64
    %v1535 = vpop.permute.xlu0 %1534
    %1536 = vrot.lane.b32.xlu0 %v267, 64
    %v1537 = vpop.permute.xlu0 %1536
    %1538 = vrot.lane.b32.xlu0 %v273, 64
    %v1539 = vpop.permute.xlu0 %1538
    %v1543 = vsel %vm1302, %v1322, 0
    %v1546 = vsel %vm1302, %v1324, 0
    %v1548 = vsel %vm1456, %v1539, 0
    %1550 = vmatprep.subr.mxu0 0.0
    %1551 = vmatpush1.msra.mxu0 %v1535
    %1552 = vmatprep.subr.mxu0 0.0
    %1553 = vmatpush1.msra.mxu0 %v1537
    %1554 = vmatprep.subr.mxu0 0.0
    %1555 = vmatpush1.msra.mxu0 %v1548
    %1556 = vmatprep.subr.mxu0 0.0
    %1557 = vmatpush1.msra.mxu0 0.0
    %1558 = vmatprep.subr.mxu0 0.0
    %1559 = vmatpush1.msra.mxu0 0.0
    %1560 = vmatprep.subr.mxu0 0.0
    %1561 = vmatpush1.msra.mxu0 0.0
    %1562 = vmatprep.subr.mxu0 0.0
    %1563 = vmatpush1.msra.mxu0 0.0
    %1564 = vmatprep.subr.mxu0 0.0
    %1565 = vmatpush1.msra.mxu0 0.0
    %1566 = vmatprep.subr.mxu0 0.0
    %1567 = vmatpush1.msra.mxu0 0.0
    %1568 = vmatprep.subr.mxu0 0.0
    %1569 = vmatpush1.msra.mxu0 0.0
    %1570 = vmatprep.subr.mxu0 0.0
    %1571 = vmatpush1.msra.mxu0 0.0
    %1572 = vmatprep.subr.mxu0 0.0
    %1573 = vmatpush1.msra.mxu0 0.0
    %1574 = vmatprep.subr.mxu0 0.0
    %1575 = vmatpush1.msra.mxu0 0.0
    %1576 = vmatprep.subr.mxu0 0.0
    %1577 = vmatpush1.msra.mxu0 0.0
    %1578 = vmatprep.subr.mxu0 0.0
    %1579 = vmatpush1.msra.mxu0 0.0
    %1580 = vmatprep.subr.mxu0 0.0
    %1581 = vmatpush1.msra.mxu0 0.0
    %1582 = vmatprep.subr.mxu0 0.0
    %1583 = vmatpush1.msra.mxu0 0.0
    %1584 = vmatprep.subr.mxu0 0.0
    %1585 = vmatpush1.msra.mxu0 0.0
    %1586 = vmatprep.subr.mxu0 0.0
    %1587 = vmatpush1.msra.mxu0 0.0
    %1588 = vmatprep.subr.mxu0 0.0
    %1589 = vmatpush1.msra.mxu0 0.0
    %1590 = vmatprep.subr.mxu0 0.0
    %1591 = vmatpush1.msra.mxu0 0.0
    %1592 = vmatprep.subr.mxu0 0.0
    %1593 = vmatpush1.msra.mxu0 0.0
    %1594 = vmatprep.subr.mxu0 0.0
    %1595 = vmatpush1.msra.mxu0 0.0
    %1596 = vmatprep.subr.mxu0 0.0
    %1597 = vmatpush1.msra.mxu0 0.0
    %1598 = vmatprep.subr.mxu0 0.0
    %1599 = vmatpush1.msra.mxu0 0.0
    %1600 = vmatprep.subr.mxu0 0.0
    %1601 = vmatpush1.msra.mxu0 0.0
    %1602 = vmatprep.subr.mxu0 0.0
    %1603 = vmatpush1.msra.mxu0 0.0
    %1604 = vmatprep.subr.mxu0 0.0
    %1605 = vmatpush1.msra.mxu0 0.0
    %1606 = vmatprep.subr.mxu0 0.0
    %1607 = vmatpush1.msra.mxu0 0.0
    %1608 = vmatprep.subr.mxu0 0.0
    %1609 = vmatpush1.msra.mxu0 0.0
    %1610 = vmatprep.subr.mxu0 0.0
    %1611 = vmatpush1.msra.mxu0 0.0
    %1612 = vmatprep.subr.mxu0 0.0
    %1613 = vmatpush1.msra.mxu0 0.0
    %1614 = vmatprep.mubr.f32.mxu0 0.0
    %1615 = vmatmul.mubr.f32.gmra.mrb[0].mxu0 %v1543
    %v1616 = vpop.f32.mrb[0].mxu0
    %v1617 = vadd.f32 %v1526, %v1616
    %v1618 = vpop.f32.mrb[0].mxu0
    %1619 = vmatprep.mubr.f32.mxu0 0.0
    %1620 = vmatmul.mubr.f32.gmra.mrb[0].mxu0 %v1546
    %v1621 = vpop.f32.mrb[0].mxu0
    %v1622 = vadd.f32 %v1531, %v1621
    %v1623 = vpop.f32.mrb[0].mxu0
    %1624 = vdwg.mxu0
    %1625 = vrot.lane.b32.xlu0 %v1204, 96
    %v1626 = vpop.permute.xlu0 %1625
    %1627 = vrot.lane.b32.xlu0 %v1209, 96
    %v1628 = vpop.permute.xlu0 %1627
    %1629 = vrot.lane.b32.xlu0 %v261, 96
    %v1630 = vpop.permute.xlu0 %1629
    %1631 = vrot.lane.b32.xlu0 %v267, 96
    %v1632 = vpop.permute.xlu0 %1631
    %1633 = vrot.lane.b32.xlu0 %v273, 96
    %v1634 = vpop.permute.xlu0 %1633
    %v1635 = vsel %vm283, %v1626, 0
    %v1637 = vsel %vm283, %v1628, 0
    %v1639 = vsel %vm283, %v1630, 0
    %v1641 = vsel %vm283, %v1632, 0
    %v1643 = vsel %vm283, %v1634, 0
    %1645 = vmatprep.subr.mxu0 0.0
    %1646 = vmatpush1.xpose.msra.mxu0 %v1639
    %1647 = vmatprep.subr.mxu0 0.0
    %1648 = vmatpush1.xpose.msra.mxu0 %v1641
    %1649 = vmatprep.subr.mxu0 0.0
    %1650 = vmatpush1.xpose.msra.mxu0 %v1643
    %1651 = vmatprep.subr.mxu0 0.0
    %1652 = vmatpush1.xpose.msra.mxu0 0.0
    %1653 = vmatprep.subr.mxu0 0.0
    %1654 = vmatpush1.xpose.msra.mxu0 0.0
    %1655 = vmatprep.subr.mxu0 0.0
    %1656 = vmatpush1.xpose.msra.mxu0 0.0
    %1657 = vmatprep.subr.mxu0 0.0
    %1658 = vmatpush1.xpose.msra.mxu0 0.0
    %1659 = vmatprep.subr.mxu0 0.0
    %1660 = vmatpush1.xpose.msra.mxu0 0.0
    %1661 = vmatprep.subr.mxu0 0.0
    %1662 = vmatpush1.xpose.msra.mxu0 0.0
    %1663 = vmatprep.subr.mxu0 0.0
    %1664 = vmatpush1.xpose.msra.mxu0 0.0
    %1665 = vmatprep.subr.mxu0 0.0
    %1666 = vmatpush1.xpose.msra.mxu0 0.0
    %1667 = vmatprep.subr.mxu0 0.0
    %1668 = vmatpush1.xpose.msra.mxu0 0.0
    %1669 = vmatprep.subr.mxu0 0.0
    %1670 = vmatpush1.xpose.msra.mxu0 0.0
    %1671 = vmatprep.subr.mxu0 0.0
    %1672 = vmatpush1.xpose.msra.mxu0 0.0
    %1673 = vmatprep.subr.mxu0 0.0
    %1674 = vmatpush1.xpose.msra.mxu0 0.0
    %1675 = vmatprep.subr.mxu0 0.0
    %1676 = vmatpush1.xpose.msra.mxu0 0.0
    %1677 = vmatprep.subr.mxu0 0.0
    %1678 = vmatpush1.xpose.msra.mxu0 0.0
    %1679 = vmatprep.subr.mxu0 0.0
    %1680 = vmatpush1.xpose.msra.mxu0 0.0
    %1681 = vmatprep.subr.mxu0 0.0
    %1682 = vmatpush1.xpose.msra.mxu0 0.0
    %1683 = vmatprep.subr.mxu0 0.0
    %1684 = vmatpush1.xpose.msra.mxu0 0.0
    %1685 = vmatprep.subr.mxu0 0.0
    %1686 = vmatpush1.xpose.msra.mxu0 0.0
    %1687 = vmatprep.subr.mxu0 0.0
    %1688 = vmatpush1.xpose.msra.mxu0 0.0
    %1689 = vmatprep.subr.mxu0 0.0
    %1690 = vmatpush1.xpose.msra.mxu0 0.0
    %1691 = vmatprep.subr.mxu0 0.0
    %1692 = vmatpush1.xpose.msra.mxu0 0.0
    %1693 = vmatprep.subr.mxu0 0.0
    %1694 = vmatpush1.xpose.msra.mxu0 0.0
    %1695 = vmatprep.subr.mxu0 0.0
    %1696 = vmatpush1.xpose.msra.mxu0 0.0
    %1697 = vmatprep.subr.mxu0 0.0
    %1698 = vmatpush1.xpose.msra.mxu0 0.0
    %1699 = vmatprep.subr.mxu0 0.0
    %1700 = vmatpush1.xpose.msra.mxu0 0.0
    %1701 = vmatprep.subr.mxu0 0.0
    %1702 = vmatpush1.xpose.msra.mxu0 0.0
    %1703 = vmatprep.subr.mxu0 0.0
    %1704 = vmatpush1.xpose.msra.mxu0 0.0
    %1705 = vmatprep.subr.mxu0 0.0
    %1706 = vmatpush1.xpose.msra.mxu0 0.0
    %1707 = vmatprep.subr.mxu0 0.0
    %1708 = vmatpush1.xpose.msra.mxu0 0.0
    %1709 = vmatprep.mubr.f32.mxu0 0.0
    %1710 = vmatmul.mubr.f32.gmra.mrb[0].mxu0 %v1635
    %v1711 = vpop.f32.mrb[0].mxu0
    %v1712 = vadd.f32 %v46, %v1711
    %v1713 = vpop.f32.mrb[0].mxu0
    %1714 = vmatprep.mubr.f32.mxu0 0.0
    %1715 = vmatmul.mubr.f32.gmra.mrb[0].mxu0 %v1637
    %v1716 = vpop.f32.mrb[0].mxu0
    %v1717 = vadd.f32 %v48, %v1716
    %v1718 = vpop.f32.mrb[0].mxu0
    %1719 = vdwg.mxu0
    %v1720 = vsel %vm1302, %v1712, -inf
    %1721 = vmax.xlane.f32.xlu0 %v1720
    %v1722 = vpop.xlane.xlu0 %1721
    %v1723 = vsel %vm1302, %v1717, -inf
    %1724 = vmax.xlane.f32.xlu0 %v1723
    %v1725 = vpop.xlane.xlu0 %1724
    %v1726 = vsub.f32 %v1712, %v1722
    %v1727 = vsub.f32 %v1717, %v1725
    %v1728 = vmul.f32 %v1726, 1.442695
    %v1729 = vpow.pop %v1728
    %v1730 = vmul.f32 %v1727, 1.442695
    %v1731 = vpow.pop %v1730
    %v1732 = vsel %vm1302, %v1729, 0.0
    %1733 = vadd.xlane.f32.xlu0 %v1732
    %v1734 = vpop.xlane.xlu0 %1733
    %v1735 = vsel %vm1302, %v1731, 0.0
    %1736 = vadd.xlane.f32.xlu0 %v1735
    %v1737 = vpop.xlane.xlu0 %1736
    %v1738 = vrcp.pop %v1734
    %v1739 = vmul.f32 %v1729, %v1738
    %v1740 = vrcp.pop %v1737
    %v1741 = vmul.f32 %v1731, %v1740
    %v1743 = vsel %vm1302, %v1739, 0
    %v1746 = vsel %vm1302, %v1741, 0
    %v1749 = vsel %vm1456, %v275, 0
    %1751 = vmatprep.subr.mxu0 0.0
    %1752 = vmatpush1.msra.mxu0 %v263
    %1753 = vmatprep.subr.mxu0 0.0
    %1754 = vmatpush1.msra.mxu0 %v269
    %1755 = vmatprep.subr.mxu0 0.0
    %1756 = vmatpush1.msra.mxu0 %v1749
    %1757 = vmatprep.subr.mxu0 0.0
    %1758 = vmatpush1.msra.mxu0 0.0
    %1759 = vmatprep.subr.mxu0 0.0
    %1760 = vmatpush1.msra.mxu0 0.0
    %1761 = vmatprep.subr.mxu0 0.0
    %1762 = vmatpush1.msra.mxu0 0.0
    %1763 = vmatprep.subr.mxu0 0.0
    %1764 = vmatpush1.msra.mxu0 0.0
    %1765 = vmatprep.subr.mxu0 0.0
    %1766 = vmatpush1.msra.mxu0 0.0
    %1767 = vmatprep.subr.mxu0 0.0
    %1768 = vmatpush1.msra.mxu0 0.0
    %1769 = vmatprep.subr.mxu0 0.0
    %1770 = vmatpush1.msra.mxu0 0.0
    %1771 = vmatprep.subr.mxu0 0.0
    %1772 = vmatpush1.msra.mxu0 0.0
    %1773 = vmatprep.subr.mxu0 0.0
    %1774 = vmatpush1.msra.mxu0 0.0
    %1775 = vmatprep.subr.mxu0 0.0
    %1776 = vmatpush1.msra.mxu0 0.0
    %1777 = vmatprep.subr.mxu0 0.0
    %1778 = vmatpush1.msra.mxu0 0.0
    %1779 = vmatprep.subr.mxu0 0.0
    %1780 = vmatpush1.msra.mxu0 0.0
    %1781 = vmatprep.subr.mxu0 0.0
    %1782 = vmatpush1.msra.mxu0 0.0
    %1783 = vmatprep.subr.mxu0 0.0
    %1784 = vmatpush1.msra.mxu0 0.0
    %1785 = vmatprep.subr.mxu0 0.0
    %1786 = vmatpush1.msra.mxu0 0.0
    %1787 = vmatprep.subr.mxu0 0.0
    %1788 = vmatpush1.msra.mxu0 0.0
    %1789 = vmatprep.subr.mxu0 0.0
    %1790 = vmatpush1.msra.mxu0 0.0
    %1791 = vmatprep.subr.mxu0 0.0
    %1792 = vmatpush1.msra.mxu0 0.0
    %1793 = vmatprep.subr.mxu0 0.0
    %1794 = vmatpush1.msra.mxu0 0.0
    %1795 = vmatprep.subr.mxu0 0.0
    %1796 = vmatpush1.msra.mxu0 0.0
    %1797 = vmatprep.subr.mxu0 0.0
    %1798 = vmatpush1.msra.mxu0 0.0
    %1799 = vmatprep.subr.mxu0 0.0
    %1800 = vmatpush1.msra.mxu0 0.0
    %1801 = vmatprep.subr.mxu0 0.0
    %1802 = vmatpush1.msra.mxu0 0.0
    %1803 = vmatprep.subr.mxu0 0.0
    %1804 = vmatpush1.msra.mxu0 0.0
    %1805 = vmatprep.subr.mxu0 0.0
    %1806 = vmatpush1.msra.mxu0 0.0
    %1807 = vmatprep.subr.mxu0 0.0
    %1808 = vmatpush1.msra.mxu0 0.0
    %1809 = vmatprep.subr.mxu0 0.0
    %1810 = vmatpush1.msra.mxu0 0.0
    %1811 = vmatprep.subr.mxu0 0.0
    %1812 = vmatpush1.msra.mxu0 0.0
    %1813 = vmatprep.subr.mxu0 0.0
    %1814 = vmatpush1.msra.mxu0 0.0
    %1815 = vmatprep.mubr.f32.mxu0 0.0
    %1816 = vmatmul.mubr.f32.gmra.mrb[0].mxu0 %v1743
    %v1817 = vpop.f32.mrb[0].mxu0
    %v1818 = vadd.f32 0.0, %v1817
    %v1819 = vpop.f32.mrb[0].mxu0
    %1820 = vmatprep.mubr.f32.mxu0 0.0
    %1821 = vmatmul.mubr.f32.gmra.mrb[0].mxu0 %v1746
    %v1822 = vpop.f32.mrb[0].mxu0
    %v1823 = vadd.f32 0.0, %v1822
    %v1824 = vpop.f32.mrb[0].mxu0
    %1825 = vdwg.mxu0
    %v1826 = vadd.f32 %v1617, %v1818
    %v1827 = vadd.f32 %v1622, %v1823
    %1828 = vrot.lane.b32.xlu0 %v1204, 80
    %v1829 = vpop.permute.xlu0 %1828
    %1830 = vrot.lane.b32.xlu0 %v1209, 80
    %v1831 = vpop.permute.xlu0 %1830
    %1832 = vrot.lane.b32.xlu0 %v261, 80
    %v1833 = vpop.permute.xlu0 %1832
    %1834 = vrot.lane.b32.xlu0 %v267, 80
    %v1835 = vpop.permute.xlu0 %1834
    %1836 = vrot.lane.b32.xlu0 %v273, 80
    %v1837 = vpop.permute.xlu0 %1836
    %v1838 = vsel %vm283, %v1829, 0
    %v1840 = vsel %vm283, %v1831, 0
    %v1842 = vsel %vm283, %v1833, 0
    %v1844 = vsel %vm283, %v1835, 0
    %v1846 = vsel %vm283, %v1837, 0
    %1848 = vmatprep.subr.mxu0 0.0
    %1849 = vmatpush1.xpose.msra.mxu0 %v1842
    %1850 = vmatprep.subr.mxu0 0.0
    %1851 = vmatpush1.xpose.msra.mxu0 %v1844
    %1852 = vmatprep.subr.mxu0 0.0
    %1853 = vmatpush1.xpose.msra.mxu0 %v1846
    %1854 = vmatprep.subr.mxu0 0.0
    %1855 = vmatpush1.xpose.msra.mxu0 0.0
    %1856 = vmatprep.subr.mxu0 0.0
    %1857 = vmatpush1.xpose.msra.mxu0 0.0
    %1858 = vmatprep.subr.mxu0 0.0
    %1859 = vmatpush1.xpose.msra.mxu0 0.0
    %1860 = vmatprep.subr.mxu0 0.0
    %1861 = vmatpush1.xpose.msra.mxu0 0.0
    %1862 = vmatprep.subr.mxu0 0.0
    %1863 = vmatpush1.xpose.msra.mxu0 0.0
    %1864 = vmatprep.subr.mxu0 0.0
    %1865 = vmatpush1.xpose.msra.mxu0 0.0
    %1866 = vmatprep.subr.mxu0 0.0
    %1867 = vmatpush1.xpose.msra.mxu0 0.0
    %1868 = vmatprep.subr.mxu0 0.0
    %1869 = vmatpush1.xpose.msra.mxu0 0.0
    %1870 = vmatprep.subr.mxu0 0.0
    %1871 = vmatpush1.xpose.msra.mxu0 0.0
    %1872 = vmatprep.subr.mxu0 0.0
    %1873 = vmatpush1.xpose.msra.mxu0 0.0
    %1874 = vmatprep.subr.mxu0 0.0
    %1875 = vmatpush1.xpose.msra.mxu0 0.0
    %1876 = vmatprep.subr.mxu0 0.0
    %1877 = vmatpush1.xpose.msra.mxu0 0.0
    %1878 = vmatprep.subr.mxu0 0.0
    %1879 = vmatpush1.xpose.msra.mxu0 0.0
    %1880 = vmatprep.subr.mxu0 0.0
    %1881 = vmatpush1.xpose.msra.mxu0 0.0
    %1882 = vmatprep.subr.mxu0 0.0
    %1883 = vmatpush1.xpose.msra.mxu0 0.0
    %1884 = vmatprep.subr.mxu0 0.0
    %1885 = vmatpush1.xpose.msra.mxu0 0.0
    %1886 = vmatprep.subr.mxu0 0.0
    %1887 = vmatpush1.xpose.msra.mxu0 0.0
    %1888 = vmatprep.subr.mxu0 0.0
    %1889 = vmatpush1.xpose.msra.mxu0 0.0
    %1890 = vmatprep.subr.mxu0 0.0
    %1891 = vmatpush1.xpose.msra.mxu0 0.0
    %1892 = vmatprep.subr.mxu0 0.0
    %1893 = vmatpush1.xpose.msra.mxu0 0.0
    %1894 = vmatprep.subr.mxu0 0.0
    %1895 = vmatpush1.xpose.msra.mxu0 0.0
    %1896 = vmatprep.subr.mxu0 0.0
    %1897 = vmatpush1.xpose.msra.mxu0 0.0
    %1898 = vmatprep.subr.mxu0 0.0
    %1899 = vmatpush1.xpose.msra.mxu0 0.0
    %1900 = vmatprep.subr.mxu0 0.0
    %1901 = vmatpush1.xpose.msra.mxu0 0.0
    %1902 = vmatprep.subr.mxu0 0.0
    %1903 = vmatpush1.xpose.msra.mxu0 0.0
    %1904 = vmatprep.subr.mxu0 0.0
    %1905 = vmatpush1.xpose.msra.mxu0 0.0
    %1906 = vmatprep.subr.mxu0 0.0
    %1907 = vmatpush1.xpose.msra.mxu0 0.0
    %1908 = vmatprep.subr.mxu0 0.0
    %1909 = vmatpush1.xpose.msra.mxu0 0.0
    %1910 = vmatprep.subr.mxu0 0.0
    %1911 = vmatpush1.xpose.msra.mxu0 0.0
    %1912 = vmatprep.mubr.f32.mxu0 0.0
    %1913 = vmatmul.mubr.f32.gmra.mrb[0].mxu0 %v1838
    %v1914 = vpop.f32.mrb[0].mxu0
    %v1915 = vadd.f32 %v46, %v1914
    %v1916 = vpop.f32.mrb[0].mxu0
    %1917 = vmatprep.mubr.f32.mxu0 0.0
    %1918 = vmatmul.mubr.f32.gmra.mrb[0].mxu0 %v1840
    %v1919 = vpop.f32.mrb[0].mxu0
    %v1920 = vadd.f32 %v48, %v1919
    %v1921 = vpop.f32.mrb[0].mxu0
    %1922 = vdwg.mxu0
    %v1923 = vsel %vm1302, %v1915, -inf
    %1924 = vmax.xlane.f32.xlu0 %v1923
    %v1925 = vpop.xlane.xlu0 %1924
    %v1926 = vsel %vm1302, %v1920, -inf
    %1927 = vmax.xlane.f32.xlu0 %v1926
    %v1928 = vpop.xlane.xlu0 %1927
    %v1929 = vsub.f32 %v1915, %v1925
    %v1930 = vsub.f32 %v1920, %v1928
    %v1931 = vmul.f32 %v1929, 1.442695
    %v1932 = vpow.pop %v1931
    %v1933 = vmul.f32 %v1930, 1.442695
    %v1934 = vpow.pop %v1933
    %v1935 = vsel %vm1302, %v1932, 0.0
    %1936 = vadd.xlane.f32.xlu0 %v1935
    %v1937 = vpop.xlane.xlu0 %1936
    %v1938 = vsel %vm1302, %v1934, 0.0
    %1939 = vadd.xlane.f32.xlu0 %v1938
    %v1940 = vpop.xlane.xlu0 %1939
    %v1941 = vrcp.pop %v1937
    %v1942 = vmul.f32 %v1932, %v1941
    %v1943 = vrcp.pop %v1940
    %v1944 = vmul.f32 %v1934, %v1943
    %1947 = vrot.lane.b32.xlu0 %v263, 96
    %v1948 = vpop.permute.xlu0 %1947
    %1949 = vrot.lane.b32.xlu0 %v269, 96
    %v1950 = vpop.permute.xlu0 %1949
    %1951 = vrot.lane.b32.xlu0 %v275, 96
    %v1952 = vpop.permute.xlu0 %1951
    %v1956 = vsel %vm1302, %v1942, 0
    %v1959 = vsel %vm1302, %v1944, 0
    %v1961 = vsel %vm1456, %v1952, 0
    %1963 = vmatprep.subr.mxu0 0.0
    %1964 = vmatpush1.msra.mxu0 %v1948
    %1965 = vmatprep.subr.mxu0 0.0
    %1966 = vmatpush1.msra.mxu0 %v1950
    %1967 = vmatprep.subr.mxu0 0.0
    %1968 = vmatpush1.msra.mxu0 %v1961
    %1969 = vmatprep.subr.mxu0 0.0
    %1970 = vmatpush1.msra.mxu0 0.0
    %1971 = vmatprep.subr.mxu0 0.0
    %1972 = vmatpush1.msra.mxu0 0.0
    %1973 = vmatprep.subr.mxu0 0.0
    %1974 = vmatpush1.msra.mxu0 0.0
    %1975 = vmatprep.subr.mxu0 0.0
    %1976 = vmatpush1.msra.mxu0 0.0
    %1977 = vmatprep.subr.mxu0 0.0
    %1978 = vmatpush1.msra.mxu0 0.0
    %1979 = vmatprep.subr.mxu0 0.0
    %1980 = vmatpush1.msra.mxu0 0.0
    %1981 = vmatprep.subr.mxu0 0.0
    %1982 = vmatpush1.msra.mxu0 0.0
    %1983 = vmatprep.subr.mxu0 0.0
    %1984 = vmatpush1.msra.mxu0 0.0
    %1985 = vmatprep.subr.mxu0 0.0
    %1986 = vmatpush1.msra.mxu0 0.0
    %1987 = vmatprep.subr.mxu0 0.0
    %1988 = vmatpush1.msra.mxu0 0.0
    %1989 = vmatprep.subr.mxu0 0.0
    %1990 = vmatpush1.msra.mxu0 0.0
    %1991 = vmatprep.subr.mxu0 0.0
    %1992 = vmatpush1.msra.mxu0 0.0
    %1993 = vmatprep.subr.mxu0 0.0
    %1994 = vmatpush1.msra.mxu0 0.0
    %1995 = vmatprep.subr.mxu0 0.0
    %1996 = vmatpush1.msra.mxu0 0.0
    %1997 = vmatprep.subr.mxu0 0.0
    %1998 = vmatpush1.msra.mxu0 0.0
    %1999 = vmatprep.subr.mxu0 0.0
    %2000 = vmatpush1.msra.mxu0 0.0
    %2001 = vmatprep.subr.mxu0 0.0
    %2002 = vmatpush1.msra.mxu0 0.0
    %2003 = vmatprep.subr.mxu0 0.0
    %2004 = vmatpush1.msra.mxu0 0.0
    %2005 = vmatprep.subr.mxu0 0.0
    %2006 = vmatpush1.msra.mxu0 0.0
    %2007 = vmatprep.subr.mxu0 0.0
    %2008 = vmatpush1.msra.mxu0 0.0
    %2009 = vmatprep.subr.mxu0 0.0
    %2010 = vmatpush1.msra.mxu0 0.0
    %2011 = vmatprep.subr.mxu0 0.0
    %2012 = vmatpush1.msra.mxu0 0.0
    %2013 = vmatprep.subr.mxu0 0.0
    %2014 = vmatpush1.msra.mxu0 0.0
    %2015 = vmatprep.subr.mxu0 0.0
    %2016 = vmatpush1.msra.mxu0 0.0
    %2017 = vmatprep.subr.mxu0 0.0
    %2018 = vmatpush1.msra.mxu0 0.0
    %2019 = vmatprep.subr.mxu0 0.0
    %2020 = vmatpush1.msra.mxu0 0.0
    %2021 = vmatprep.subr.mxu0 0.0
    %2022 = vmatpush1.msra.mxu0 0.0
    %2023 = vmatprep.subr.mxu0 0.0
    %2024 = vmatpush1.msra.mxu0 0.0
    %2025 = vmatprep.subr.mxu0 0.0
    %2026 = vmatpush1.msra.mxu0 0.0
    %2027 = vmatprep.mubr.f32.mxu0 0.0
    %2028 = vmatmul.mubr.f32.gmra.mrb[0].mxu0 %v1956
    %v2029 = vpop.f32.mrb[0].mxu0
    %v2030 = vadd.f32 0.0, %v2029
    %v2031 = vpop.f32.mrb[0].mxu0
    %2032 = vmatprep.mubr.f32.mxu0 0.0
    %2033 = vmatmul.mubr.f32.gmra.mrb[0].mxu0 %v1959
    %v2034 = vpop.f32.mrb[0].mxu0
    %v2035 = vadd.f32 0.0, %v2034
    %v2036 = vpop.f32.mrb[0].mxu0
    %2037 = vdwg.mxu0
    %v2038 = vadd.f32 %v1826, %v2030
    %v2039 = vadd.f32 %v1827, %v2035
    %v2040 = vlaneseq
    %v2041 = vshrl.u32 %v2040, 7
    %v2042 = vsub.s32 3, %v2041
    %v2043 = vrot.slane %v40, %v2042
    %v2044 = vadd.f32 %v2038, %v2043
    %v2045 = vadd.f32 %v2039, %v2043
    %v2046 = vadd.f32 %v2044, %v1121
    %v2047 = vadd.f32 %v2045, %v1122
    %v2048 = vsel %vm81, %v2046, 0.0
    %2049 = vadd.xlane.f32.xlu0 %v2048
    %v2050 = vpop.xlane.xlu0 %2049
    %v2051 = vsel %vm81, %v2047, 0.0
    %2052 = vadd.xlane.f32.xlu0 %v2051
    %v2053 = vpop.xlane.xlu0 %2052
    %v2054 = vmul.f32 %v2050, %v1090
    %v2055 = vmul.f32 %v2053, %v1090
    %v2056 = vsub.f32 %v2046, %v2054
    %v2057 = vsub.f32 %v2047, %v2055
    %v2058 = vmul.f32 %v2056, %v2056
    %v2059 = vmul.f32 %v2057, %v2057
    %v2060 = vsel %vm81, %v2058, 0.0
    %2061 = vadd.xlane.f32.xlu0 %v2060
    %v2062 = vpop.xlane.xlu0 %2061
    %v2063 = vsel %vm81, %v2059, 0.0
    %2064 = vadd.xlane.f32.xlu0 %v2063
    %v2065 = vpop.xlane.xlu0 %2064
    %v2066 = vmul.f32 %v2062, %v1090
    %v2067 = vmul.f32 %v2065, %v1090
    %v2068 = vadd.f32 %v2066, 1e-05
    %v2069 = vadd.f32 %v2067, 1e-05
    %v2070 = vrsqrt.pop %v2068
    %v2071 = vrsqrt.pop %v2069
    %v2072 = vmul.f32 %v2056, %v2070
    %v2073 = vmul.f32 %v2057, %v2071
    %v2074 = vlaneseq
    %v2075 = vshrl.u32 %v2074, 7
    %v2076 = vsub.s32 7, %v2075
    %v2077 = vrot.slane %v40, %v2076
    %v2078 = vmul.f32 %v2072, %v2077
    %v2079 = vmul.f32 %v2073, %v2077
    %v2080 = vlaneseq
    %v2081 = vshrl.u32 %v2080, 7
    %v2082 = vsub.s32 0, %v2081
    %v2083 = vrot.slane %v44, %v2082
    %v2084 = vadd.f32 %v2078, %v2083
    %v2085 = vadd.f32 %v2079, %v2083
    %v2087 = vsel %vm81, %v2084, 0
    %v2090 = vsel %vm81, %v2085, 0
    %2092 = vmatprep.subr.mxu0 0.0
    %2093 = vmatpush1.msra.mxu0 %v1123
    %2094 = vmatprep.subr.mxu0 0.0
    %2095 = vmatpush1.msra.mxu0 %v1124
    %2096 = vmatprep.subr.mxu0 0.0
    %2097 = vmatpush1.msra.mxu0 %v1125
    %2098 = vmatprep.subr.mxu0 0.0
    %2099 = vmatpush1.msra.mxu0 %v1126
    %2100 = vmatprep.subr.mxu0 0.0
    %2101 = vmatpush1.msra.mxu0 0.0
    %2102 = vmatprep.subr.mxu0 0.0
    %2103 = vmatpush1.msra.mxu0 0.0
    %2104 = vmatprep.subr.mxu0 0.0
    %2105 = vmatpush1.msra.mxu0 0.0
    %2106 = vmatprep.subr.mxu0 0.0
    %2107 = vmatpush1.msra.mxu0 0.0
    %2108 = vmatprep.subr.mxu0 0.0
    %2109 = vmatpush1.msra.mxu0 0.0
    %2110 = vmatprep.subr.mxu0 0.0
    %2111 = vmatpush1.msra.mxu0 0.0
    %2112 = vmatprep.subr.mxu0 0.0
    %2113 = vmatpush1.msra.mxu0 0.0
    %2114 = vmatprep.subr.mxu0 0.0
    %2115 = vmatpush1.msra.mxu0 0.0
    %2116 = vmatprep.subr.mxu0 0.0
    %2117 = vmatpush1.msra.mxu0 0.0
    %2118 = vmatprep.subr.mxu0 0.0
    %2119 = vmatpush1.msra.mxu0 0.0
    %2120 = vmatprep.subr.mxu0 0.0
    %2121 = vmatpush1.msra.mxu0 0.0
    %2122 = vmatprep.subr.mxu0 0.0
    %2123 = vmatpush1.msra.mxu0 0.0
    %2124 = vmatprep.subr.mxu0 0.0
    %2125 = vmatpush1.msra.mxu0 0.0
    %2126 = vmatprep.subr.mxu0 0.0
    %2127 = vmatpush1.msra.mxu0 0.0
    %2128 = vmatprep.subr.mxu0 0.0
    %2129 = vmatpush1.msra.mxu0 0.0
    %2130 = vmatprep.subr.mxu0 0.0
    %2131 = vmatpush1.msra.mxu0 0.0
    %2132 = vmatprep.subr.mxu0 0.0
    %2133 = vmatpush1.msra.mxu0 0.0
    %2134 = vmatprep.subr.mxu0 0.0
    %2135 = vmatpush1.msra.mxu0 0.0
    %2136 = vmatprep.subr.mxu0 0.0
    %2137 = vmatpush1.msra.mxu0 0.0
    %2138 = vmatprep.subr.mxu0 0.0
    %2139 = vmatpush1.msra.mxu0 0.0
    %2140 = vmatprep.subr.mxu0 0.0
    %2141 = vmatpush1.msra.mxu0 0.0
    %2142 = vmatprep.subr.mxu0 0.0
    %2143 = vmatpush1.msra.mxu0 0.0
    %2144 = vmatprep.subr.mxu0 0.0
    %2145 = vmatpush1.msra.mxu0 0.0
    %2146 = vmatprep.subr.mxu0 0.0
    %2147 = vmatpush1.msra.mxu0 0.0
    %2148 = vmatprep.subr.mxu0 0.0
    %2149 = vmatpush1.msra.mxu0 0.0
    %2150 = vmatprep.subr.mxu0 0.0
    %2151 = vmatpush1.msra.mxu0 0.0
    %2152 = vmatprep.subr.mxu0 0.0
    %2153 = vmatpush1.msra.mxu0 0.0
    %2154 = vmatprep.subr.mxu0 0.0
    %2155 = vmatpush1.msra.mxu0 0.0
    %2156 = vmatprep.mubr.f32.mxu0 0.0
    %2157 = vmatmul.mubr.f32.gmra.mrb[0].mxu0 %v2087
    %v2158 = vpop.f32.mrb[0].mxu0
    %v2159 = vadd.f32 %v1130, %v2158
    %v2160 = vpop.f32.mrb[0].mxu0
    %2161 = vmatprep.mubr.f32.mxu0 0.0
    %2162 = vmatmul.mubr.f32.gmra.mrb[0].mxu0 %v2090
    %v2163 = vpop.f32.mrb[0].mxu0
    %v2164 = vadd.f32 %v1130, %v2163
    %v2165 = vpop.f32.mrb[0].mxu0
    %2166 = vdwg.mxu0
    %v2167 = vmax.f32 %v2159, 0.0
    %v2168 = vmax.f32 %v2164, 0.0
    %v2169 = vld [vmem:[%s3] sm:$0xff]
    %v2170 = vld [vmem:[%s3 + $0x8] sm:$0xff]
    %v2171 = vld [vmem:[%s3 + $0x10] sm:$0xff]
    %v2172 = vld [vmem:[%s3 + $0x18] sm:$0xff]
    %v2173 = vld [vmem:[%s3 + $0x20] sm:$0xff]
    %v2174 = vld [vmem:[%s3 + $0x28] sm:$0xff]
    %v2175 = vld [vmem:[%s3 + $0x30] sm:$0xff]
    %v2176 = vld [vmem:[%s3 + $0x38] sm:$0xff]
    %v2177 = vld [vmem:[%s3 + $0x40] sm:$0xff]
    %v2178 = vld [vmem:[%s3 + $0x48] sm:$0xff]
    %v2179 = vld [vmem:[%s3 + $0x50] sm:$0xff]
    %v2180 = vld [vmem:[%s3 + $0x58] sm:$0xff]
    %v2181 = vld [vmem:[%s3 + $0x60] sm:$0xff]
    %v2182 = vld [vmem:[%s3 + $0x68] sm:$0xff]
    %v2183 = vld [vmem:[%s3 + $0x70] sm:$0xff]
    %v2184 = vld [vmem:[%s3 + $0x78] sm:$0xff]
    %v2185 = vlaneseq
    %v2186 = vshrl.u32 %v2185, 7
    %v2187 = vsub.s32 4, %v2186
    %v2188 = vrot.slane %v40, %v2187
    %2189 = vmatprep.subr.mxu0 0.0
    %2190 = vmatpush1.msra.mxu0 %v2169
    %2191 = vmatprep.subr.mxu0 0.0
    %2192 = vmatpush1.msra.mxu0 %v2170
    %2193 = vmatprep.subr.mxu0 0.0
    %2194 = vmatpush1.msra.mxu0 %v2171
    %2195 = vmatprep.subr.mxu0 0.0
    %2196 = vmatpush1.msra.mxu0 %v2172
    %2197 = vmatprep.subr.mxu0 0.0
    %2198 = vmatpush1.msra.mxu0 %v2173
    %2199 = vmatprep.subr.mxu0 0.0
    %2200 = vmatpush1.msra.mxu0 %v2174
    %2201 = vmatprep.subr.mxu0 0.0
    %2202 = vmatpush1.msra.mxu0 %v2175
    %2203 = vmatprep.subr.mxu0 0.0
    %2204 = vmatpush1.msra.mxu0 %v2176
    %2205 = vmatprep.subr.mxu0 0.0
    %2206 = vmatpush1.msra.mxu0 %v2177
    %2207 = vmatprep.subr.mxu0 0.0
    %2208 = vmatpush1.msra.mxu0 %v2178
    %2209 = vmatprep.subr.mxu0 0.0
    %2210 = vmatpush1.msra.mxu0 %v2179
    %2211 = vmatprep.subr.mxu0 0.0
    %2212 = vmatpush1.msra.mxu0 %v2180
    %2213 = vmatprep.subr.mxu0 0.0
    %2214 = vmatpush1.msra.mxu0 %v2181
    %2215 = vmatprep.subr.mxu0 0.0
    %2216 = vmatpush1.msra.mxu0 %v2182
    %2217 = vmatprep.subr.mxu0 0.0
    %2218 = vmatpush1.msra.mxu0 %v2183
    %2219 = vmatprep.subr.mxu0 0.0
    %2220 = vmatpush1.msra.mxu0 %v2184
    %2221 = vmatprep.subr.mxu0 0.0
    %2222 = vmatpush1.msra.mxu0 0.0
    %2223 = vmatprep.subr.mxu0 0.0
    %2224 = vmatpush1.msra.mxu0 0.0
    %2225 = vmatprep.subr.mxu0 0.0
    %2226 = vmatpush1.msra.mxu0 0.0
    %2227 = vmatprep.subr.mxu0 0.0
    %2228 = vmatpush1.msra.mxu0 0.0
    %2229 = vmatprep.subr.mxu0 0.0
    %2230 = vmatpush1.msra.mxu0 0.0
    %2231 = vmatprep.subr.mxu0 0.0
    %2232 = vmatpush1.msra.mxu0 0.0
    %2233 = vmatprep.subr.mxu0 0.0
    %2234 = vmatpush1.msra.mxu0 0.0
    %2235 = vmatprep.subr.mxu0 0.0
    %2236 = vmatpush1.msra.mxu0 0.0
    %2237 = vmatprep.subr.mxu0 0.0
    %2238 = vmatpush1.msra.mxu0 0.0
    %2239 = vmatprep.subr.mxu0 0.0
    %2240 = vmatpush1.msra.mxu0 0.0
    %2241 = vmatprep.subr.mxu0 0.0
    %2242 = vmatpush1.msra.mxu0 0.0
    %2243 = vmatprep.subr.mxu0 0.0
    %2244 = vmatpush1.msra.mxu0 0.0
    %2245 = vmatprep.subr.mxu0 0.0
    %2246 = vmatpush1.msra.mxu0 0.0
    %2247 = vmatprep.subr.mxu0 0.0
    %2248 = vmatpush1.msra.mxu0 0.0
    %2249 = vmatprep.subr.mxu0 0.0
    %2250 = vmatpush1.msra.mxu0 0.0
    %2251 = vmatprep.subr.mxu0 0.0
    %2252 = vmatpush1.msra.mxu0 0.0
    %2253 = vmatprep.mubr.f32.mxu0 0.0
    %2254 = vmatmul.mubr.f32.gmra.mrb[0].mxu0 %v2167
    %v2255 = vpop.f32.mrb[0].mxu0
    %v2256 = vadd.f32 %v2188, %v2255
    %v2257 = vpop.f32.mrb[0].mxu0
    %2258 = vmatprep.mubr.f32.mxu0 0.0
    %2259 = vmatmul.mubr.f32.gmra.mrb[0].mxu0 %v2168
    %v2260 = vpop.f32.mrb[0].mxu0
    %v2261 = vadd.f32 %v2188, %v2260
    %v2262 = vpop.f32.mrb[0].mxu0
    %2263 = vdwg.mxu0
    %v2264 = vadd.f32 %v2256, %v2084
    %v2265 = vadd.f32 %v2261, %v2085
    %v2266 = vsel %vm81, %v2264, 0.0
    %2267 = vadd.xlane.f32.xlu0 %v2266
    %v2268 = vpop.xlane.xlu0 %2267
    %v2269 = vsel %vm81, %v2265, 0.0
    %2270 = vadd.xlane.f32.xlu0 %v2269
    %v2271 = vpop.xlane.xlu0 %2270
    %v2272 = vmul.f32 %v2268, %v1090
    %v2273 = vmul.f32 %v2271, %v1090
    %v2274 = vsub.f32 %v2264, %v2272
    %v2275 = vsub.f32 %v2265, %v2273
    %v2276 = vmul.f32 %v2274, %v2274
    %v2277 = vmul.f32 %v2275, %v2275
    %v2278 = vsel %vm81, %v2276, 0.0
    %2279 = vadd.xlane.f32.xlu0 %v2278
    %v2280 = vpop.xlane.xlu0 %2279
    %v2281 = vsel %vm81, %v2277, 0.0
    %2282 = vadd.xlane.f32.xlu0 %v2281
    %v2283 = vpop.xlane.xlu0 %2282
    %v2284 = vmul.f32 %v2280, %v1090
    %v2285 = vmul.f32 %v2283, %v1090
    %v2286 = vadd.f32 %v2284, 1e-05
    %v2287 = vadd.f32 %v2285, 1e-05
    %v2288 = vrsqrt.pop %v2286
    %v2289 = vrsqrt.pop %v2287
    %v2290 = vmul.f32 %v2274, %v2288
    %v2291 = vmul.f32 %v2275, %v2289
    %v2292 = vlaneseq
    %v2293 = vshrl.u32 %v2292, 7
    %v2294 = vsub.s32 1, %v2293
    %v2295 = vrot.slane %v44, %v2294
    %v2296 = vmul.f32 %v2290, %v2295
    %v2297 = vmul.f32 %v2291, %v2295
    %v2298 = vlaneseq
    %v2299 = vshrl.u32 %v2298, 7
    %v2300 = vsub.s32 2, %v2299
    %v2301 = vrot.slane %v44, %v2300
    %v2302 = vadd.f32 %v2296, %v2301
    %v2303 = vadd.f32 %v2297, %v2301
    %2304 = vst.msk [vmem:[#allocation5] sm:$0xff] %vm81, %v2302
    %2305 = vst.msk [vmem:[#allocation5 + $0x8] sm:$0xff] %vm81, %v2303
    // Predicated region
    $region26: #{tpu_custom_call.1} parent=1 // pred_check
      _
    $region27: #{tpu_custom_call.1} parent=1 // pred_check_branch
      %2307 = sbr.rel (0) target = $region29
    $region28: #{tpu_custom_call.1} parent=1 // pred_region
      %s2309 = ssub.s32 256, 256
      %2310 = vsyncadd [#allocation4], %s2309
      %s2311 = sshll.u32 [#allocation5], 4
      %s2312 = int_to_ptr.vmem [resolvable:$true] %s2311
      %2317 = dma.vmem_to_hbm [thread:$0]  %s2312, 256, %s5, [#allocation4], 128, 128, 8
    $region29: #{tpu_custom_call.1} parent=1 // pred_fallthru
      _
    // Predicated region
    $region30: #{tpu_custom_call.1} parent=1 // pred_check
      _
    $region31: #{tpu_custom_call.1} parent=1 // pred_check_branch
      %2319 = sbr.rel (0) target = $region33
    $region32: #{tpu_custom_call.1} parent=1 // pred_region
      %2320 = dma.done [#allocation4], 256
    $region33: #{tpu_custom_call.1} parent=1 // pred_fallthru
      _
    %2321 = vsyncpa [#allocation3], 1
    %2322 = vsyncpa [#allocation4], 1

</llo_original>
